<compile_context>
chip_gen: v7x
topology: tpu7x:2x2x1
jax: 0.10.0
libtpu: 0.0.40
codegen_flags: <defaults>
</compile_context>

<pallas_src>
import functools

import jax
import jax.numpy as jnp
import numpy as np
from jax import lax
from jax.experimental import pallas as pl
from jax.experimental.pallas import tpu as pltpu

EPS = 1e-5


def _conv_stats_kernel(xpad_ref, w_ref, b_ref, y_ref, stats_ref):
    """Per-image 3x3 conv + bias, plus per-image partial BN sums.

    xpad_ref : (1, H+2, W+2, C)   zero-padded input image
    w_ref    : (9*C, C)           weights packed as [(ky*3+kx)*C + ci, co]
    b_ref    : (1, C)             conv bias
    y_ref    : (1, H*W, C)  f32   conv output (pre-BN)
    stats_ref: (1, 2, C)    f32   [sum(y), sum(y*y)] over this image
    """
    _, Hp, Wp, C = xpad_ref.shape
    H, W = Hp - 2, Wp - 2
    N = H * W

    xpad = xpad_ref[0]                                      # (H+2, W+2, C)

    # im2col: 9 shifted views concatenated along the channel (lane) axis.
    taps = [xpad[ky:ky + H, kx:kx + W, :].reshape(N, C)
            for ky in range(3) for kx in range(3)]
    patches = jnp.concatenate(taps, axis=1)                 # (N, 9C)

    # Single MXU contraction instead of 9 small matmuls; keep operands in
    # their native dtype (bf16 stays bf16 on v6e/v7x), accumulate in f32.
    acc = jnp.dot(patches, w_ref[...],
                  preferred_element_type=jnp.float32)       # (N, C) f32
    acc = acc + b_ref[...].astype(jnp.float32)

    # Partial BatchNorm statistics fused into the same pass over `acc`.
    stats_ref[0, 0:1, :] = jnp.sum(acc, axis=0, keepdims=True)
    stats_ref[0, 1:2, :] = jnp.sum(acc * acc, axis=0, keepdims=True)

    y_ref[...] = acc[None]                                  # (1, N, C)


def _bn_residual_kernel(x_ref, y_ref, scale_ref, shift_ref, out_ref, *,
                        apply_relu: bool):
    """out = x + (y*scale + shift) [+ ReLU], in lane-dense folded layout.

    x_ref    : (1, H, W*C)        residual input (folded NHWC view)
    y_ref    : (1, H, W*C)  f32   conv output (folded)
    scale_ref: (1, W*C)     f32   gamma * rsqrt(var+eps), tiled along W
    shift_ref: (1, W*C)     f32   beta - mean*scale,      tiled along W
    out_ref  : (1, H, W*C)
    """
    res = (x_ref[...].astype(jnp.float32)
           + y_ref[...] * scale_ref[...] + shift_ref[...])
    if apply_relu:
        res = jnp.maximum(res, 0.0)
    out_ref[...] = res.astype(out_ref.dtype)


def residual_block(x_nchw, w_oihw, bias, gamma, beta, *, apply_relu=True):
    """Pallas ResidualBlock forward. x_nchw: (B, C, H, W) like PyTorch."""
    B, C, H, W = x_nchw.shape
    N = H * W
    WC = W * C

    # Channels-last + 1-pixel zero halo (transpose+pad fuse into one XLA copy).
    x_nhwc = jnp.transpose(x_nchw, (0, 2, 3, 1))                    # (B,H,W,C)
    xpad = jnp.pad(x_nhwc, ((0, 0), (1, 1), (1, 1), (0, 0)))        # (B,H+2,W+2,C)

    # Pre-pack conv weights as (9C, C): [(ky*3+kx)*C + ci, co].
    w_flat = jnp.transpose(w_oihw, (2, 3, 1, 0)).reshape(9 * C, C)
    b2 = bias.reshape(1, C)

    # ---- pass 1: conv + per-image partial BN sums, grid over batch ---------
    y, stats = pl.pallas_call(
        _conv_stats_kernel,
        out_shape=(jax.ShapeDtypeStruct((B, N, C), jnp.float32),
                   jax.ShapeDtypeStruct((B, 2, C), jnp.float32)),
        grid=(B,),
        in_specs=[
            pl.BlockSpec((1, H + 2, W + 2, C), lambda b: (b, 0, 0, 0)),
            pl.BlockSpec((9 * C, C), lambda b: (0, 0)),
            pl.BlockSpec((1, C), lambda b: (0, 0)),
        ],
        out_specs=(
            pl.BlockSpec((1, N, C), lambda b: (b, 0, 0)),
            pl.BlockSpec((1, 2, C), lambda b: (b, 0, 0)),
        ),
        compiler_params=pltpu.CompilerParams(
            dimension_semantics=("parallel",)),
    )(xpad, w_flat, b2)

    # ---- tiny (C,)-sized epilogue: global BN stats -> per-channel affine ----
    # (BatchNorm stats must be global over (B,H,W); per-tile partials are
    #  reduced here in f32 — biased variance, eps=1e-5, to match PyTorch.)
    total = jnp.sum(stats, axis=0)                                  # (2, C)
    count = float(B * N)
    mean = total[0] / count
    var = jnp.maximum(total[1] / count - mean * mean, 0.0)
    scale = gamma.astype(jnp.float32) * lax.rsqrt(var + EPS)
    shift = beta.astype(jnp.float32) - mean * scale
    scale_f = jnp.tile(scale, W).reshape(1, WC)     # folded lane idx = w*C + c
    shift_f = jnp.tile(shift, W).reshape(1, WC)

    # Free contiguous reshapes into the lane-dense folded layout.
    x_folded = x_nhwc.reshape(B, H, WC)
    y_folded = y.reshape(B, H, WC)

    # ---- pass 2: normalize + residual + ReLU, lane-dense, grid over batch ---
    out_folded = pl.pallas_call(
        functools.partial(_bn_residual_kernel, apply_relu=apply_relu),
        out_shape=jax.ShapeDtypeStruct((B, H, WC), x_nchw.dtype),
        grid=(B,),
        in_specs=[
            pl.BlockSpec((1, H, WC), lambda b: (b, 0, 0)),
            pl.BlockSpec((1, H, WC), lambda b: (b, 0, 0)),
            pl.BlockSpec((1, WC), lambda b: (0, 0)),
            pl.BlockSpec((1, WC), lambda b: (0, 0)),
        ],
        out_specs=pl.BlockSpec((1, H, WC), lambda b: (b, 0, 0)),
        compiler_params=pltpu.CompilerParams(
            dimension_semantics=("parallel",)),
    )(x_folded, y_folded, scale_f, shift_f)

    return jnp.transpose(out_folded.reshape(B, H, W, C), (0, 3, 1, 2))


def _reference(x_nchw, w_oihw, bias, gamma, beta, *, apply_relu=True):
    """Pure-JAX reference mirroring PyTorch semantics."""
    conv = lax.conv_general_dilated(
        x_nchw.astype(jnp.float32), w_oihw.astype(jnp.float32),
        window_strides=(1, 1), padding="SAME",
        dimension_numbers=("NCHW", "OIHW", "NCHW"))
    conv = conv + bias[None, :, None, None]
    mean = jnp.mean(conv, axis=(0, 2, 3), keepdims=True)
    var = jnp.mean((conv - mean) ** 2, axis=(0, 2, 3), keepdims=True)
    bn = (conv - mean) * lax.rsqrt(var + EPS)
    bn = bn * gamma[None, :, None, None] + beta[None, :, None, None]
    out = x_nchw.astype(jnp.float32) + bn
    if apply_relu:
        out = jnp.maximum(out, 0.0)
    return out.astype(x_nchw.dtype)


if __name__ == "__main__":
    key = jax.random.PRNGKey(0)
    k_x, k_w, k_b = jax.random.split(key, 3)

    B, C, H, W = 2, 4, 16, 16
    x = jax.random.normal(k_x, (B, C, H, W), dtype=jnp.float32)

    # Conv2d weight/bias; BatchNorm2d gamma=1, beta=0 (fresh module).
    w = jax.random.normal(k_w, (C, C, 3, 3), dtype=jnp.float32) * 0.1   # OIHW
    b = jax.random.normal(k_b, (C,), dtype=jnp.float32) * 0.1
    gamma = jnp.ones((C,), dtype=jnp.float32)
    beta = jnp.zeros((C,), dtype=jnp.float32)

    out = residual_block(x, w, b, gamma, beta, apply_relu=True)
    out = jax.block_until_ready(out)

    ref = _reference(x, w, b, gamma, beta, apply_relu=True)
    np.testing.assert_allclose(np.asarray(out), np.asarray(ref),
                               rtol=1e-4, atol=1e-4)
    print("KERNEL_OK")
</pallas_src>

<mosaic_0001>
module attributes {stable_mosaic.version = 11 : i64} {
  func.func @_conv_stats_kernel(%arg0: i32, %arg1: memref<1x18x18x4xf32, #tpu.memory_space<vmem>>, %arg2: memref<36x4xf32, #tpu.memory_space<vmem>>, %arg3: memref<1x4xf32, #tpu.memory_space<vmem>>, %arg4: memref<1x256x4xf32, #tpu.memory_space<vmem>>, %arg5: memref<1x2x4xf32, #tpu.memory_space<vmem>>) attributes {dimension_semantics = [#tpu.dimension_semantics<parallel>], iteration_bounds = array<i64: 2>, scalar_prefetch = 0 : i64, scratch_operands = 0 : i64, tpu.core_type = #tpu.core_type<tc>, window_params = [{transform_indices = @transform_0, window_bounds = array<i64: 1, 18, 18, 4>}, {pipeline_mode = #tpu.pipeline_mode<synchronous>, transform_indices = @transform_1, window_bounds = array<i64: 36, 4>}, {pipeline_mode = #tpu.pipeline_mode<synchronous>, transform_indices = @transform_2, window_bounds = array<i64: 1, 4>}, {transform_indices = @transform_3, window_bounds = array<i64: 1, 256, 4>}, {transform_indices = @transform_4, window_bounds = array<i64: 1, 2, 4>}]} {
    %c0 = arith.constant 0 : index
    %c0_0 = arith.constant 0 : index
    %c0_1 = arith.constant 0 : index
    %c0_2 = arith.constant 0 : index
    %0 = vector.load %arg1[%c0, %c0_0, %c0_1, %c0_2] : memref<1x18x18x4xf32, #tpu.memory_space<vmem>>, vector<1x18x18x4xf32>
    %1 = vector.shape_cast %0 : vector<1x18x18x4xf32> to vector<18x18x4xf32>
    %2 = vector.extract_strided_slice %1 {offsets = [0, 0, 0], sizes = [16, 16, 4], strides = [1, 1, 1]} : vector<18x18x4xf32> to vector<16x16x4xf32>
    %3 = vector.shape_cast %2 : vector<16x16x4xf32> to vector<256x4xf32>
    %4 = vector.extract_strided_slice %1 {offsets = [0, 1, 0], sizes = [16, 16, 4], strides = [1, 1, 1]} : vector<18x18x4xf32> to vector<16x16x4xf32>
    %5 = vector.shape_cast %4 : vector<16x16x4xf32> to vector<256x4xf32>
    %6 = vector.extract_strided_slice %1 {offsets = [0, 2, 0], sizes = [16, 16, 4], strides = [1, 1, 1]} : vector<18x18x4xf32> to vector<16x16x4xf32>
    %7 = vector.shape_cast %6 : vector<16x16x4xf32> to vector<256x4xf32>
    %8 = vector.extract_strided_slice %1 {offsets = [1, 0, 0], sizes = [16, 16, 4], strides = [1, 1, 1]} : vector<18x18x4xf32> to vector<16x16x4xf32>
    %9 = vector.shape_cast %8 : vector<16x16x4xf32> to vector<256x4xf32>
    %10 = vector.extract_strided_slice %1 {offsets = [1, 1, 0], sizes = [16, 16, 4], strides = [1, 1, 1]} : vector<18x18x4xf32> to vector<16x16x4xf32>
    %11 = vector.shape_cast %10 : vector<16x16x4xf32> to vector<256x4xf32>
    %12 = vector.extract_strided_slice %1 {offsets = [1, 2, 0], sizes = [16, 16, 4], strides = [1, 1, 1]} : vector<18x18x4xf32> to vector<16x16x4xf32>
    %13 = vector.shape_cast %12 : vector<16x16x4xf32> to vector<256x4xf32>
    %14 = vector.extract_strided_slice %1 {offsets = [2, 0, 0], sizes = [16, 16, 4], strides = [1, 1, 1]} : vector<18x18x4xf32> to vector<16x16x4xf32>
    %15 = vector.shape_cast %14 : vector<16x16x4xf32> to vector<256x4xf32>
    %16 = vector.extract_strided_slice %1 {offsets = [2, 1, 0], sizes = [16, 16, 4], strides = [1, 1, 1]} : vector<18x18x4xf32> to vector<16x16x4xf32>
    %17 = vector.shape_cast %16 : vector<16x16x4xf32> to vector<256x4xf32>
    %18 = vector.extract_strided_slice %1 {offsets = [2, 2, 0], sizes = [16, 16, 4], strides = [1, 1, 1]} : vector<18x18x4xf32> to vector<16x16x4xf32>
    %19 = vector.shape_cast %18 : vector<16x16x4xf32> to vector<256x4xf32>
    %20 = tpu.concatenate %3, %5, %7, %9, %11, %13, %15, %17, %19 in 1 : vector<256x4xf32>, vector<256x4xf32>, vector<256x4xf32>, vector<256x4xf32>, vector<256x4xf32>, vector<256x4xf32>, vector<256x4xf32>, vector<256x4xf32>, vector<256x4xf32> -> vector<256x36xf32>
    %c0_3 = arith.constant 0 : index
    %c0_4 = arith.constant 0 : index
    %21 = vector.load %arg2[%c0_3, %c0_4] : memref<36x4xf32, #tpu.memory_space<vmem>>, vector<36x4xf32>
    %cst = arith.constant dense<0.000000e+00> : vector<256x4xf32>
    %22 = tpu.matmul %20, %21, %cst {dimension_numbers = #tpu.dot_dimension_numbers<[1], [0], [0], [1], [0, 0, 1, 1], [], []>} : vector<256x36xf32>, vector<36x4xf32>, vector<256x4xf32> -> vector<256x4xf32>
    %c0_5 = arith.constant 0 : index
    %c0_6 = arith.constant 0 : index
    %23 = vector.load %arg3[%c0_5, %c0_6] : memref<1x4xf32, #tpu.memory_space<vmem>>, vector<1x4xf32>
    %24 = vector.broadcast %23 : vector<1x4xf32> to vector<256x4xf32>
    %25 = arith.addf %22, %24 : vector<256x4xf32>
    %cst_7 = arith.constant dense<0.000000e+00> : vector<4xf32>
    %26 = vector.multi_reduction <add>, %25, %cst_7 [0] : vector<256x4xf32> to vector<4xf32>
    %27 = vector.shape_cast %26 : vector<4xf32> to vector<1x4xf32>
    %c0_8 = arith.constant 0 : index
    %c0_9 = arith.constant 0 : index
    %c0_10 = arith.constant 0 : index
    %28 = vector.load %arg5[%c0_8, %c0_9, %c0_10] : memref<1x2x4xf32, #tpu.memory_space<vmem>>, vector<1x1x4xf32>
    %29 = vector.shape_cast %28 : vector<1x1x4xf32> to vector<1x4xf32>
    %30 = vector.shape_cast %27 : vector<1x4xf32> to vector<1x1x4xf32>
    tpu.vector_store %arg5[%c0_8, %c0_9, %c0_10], %30 {strides = array<i32>} : memref<1x2x4xf32, #tpu.memory_space<vmem>>, vector<1x1x4xf32>,
    %31 = arith.mulf %25, %25 : vector<256x4xf32>
    %cst_11 = arith.constant dense<0.000000e+00> : vector<4xf32>
    %32 = vector.multi_reduction <add>, %31, %cst_11 [0] : vector<256x4xf32> to vector<4xf32>
    %33 = vector.shape_cast %32 : vector<4xf32> to vector<1x4xf32>
    %c0_12 = arith.constant 0 : index
    %c1 = arith.constant 1 : index
    %c0_13 = arith.constant 0 : index
    %34 = vector.load %arg5[%c0_12, %c1, %c0_13] : memref<1x2x4xf32, #tpu.memory_space<vmem>>, vector<1x1x4xf32>
    %35 = vector.shape_cast %34 : vector<1x1x4xf32> to vector<1x4xf32>
    %36 = vector.shape_cast %33 : vector<1x4xf32> to vector<1x1x4xf32>
    tpu.vector_store %arg5[%c0_12, %c1, %c0_13], %36 {strides = array<i32>} : memref<1x2x4xf32, #tpu.memory_space<vmem>>, vector<1x1x4xf32>,
    %37 = vector.shape_cast %25 : vector<256x4xf32> to vector<1x256x4xf32>
    %c0_14 = arith.constant 0 : index
    %c0_15 = arith.constant 0 : index
    %c0_16 = arith.constant 0 : index
    %38 = vector.load %arg4[%c0_14, %c0_15, %c0_16] : memref<1x256x4xf32, #tpu.memory_space<vmem>>, vector<1x256x4xf32>
    tpu.vector_store %arg4[%c0_14, %c0_15, %c0_16], %37 {strides = array<i32>} : memref<1x256x4xf32, #tpu.memory_space<vmem>>, vector<1x256x4xf32>,
    return
  }
  func.func @transform_0(%arg0: i32) -> (i32, i32, i32, i32) {
    %c0_i32 = arith.constant 0 : i32
    %c0_i32_0 = arith.constant 0 : i32
    %c0_i32_1 = arith.constant 0 : i32
    %c0_i32_2 = arith.constant 0 : i32
    return %arg0, %c0_i32, %c0_i32_0, %c0_i32_1 : i32, i32, i32, i32
  }
  func.func @transform_1(%arg0: i32) -> (i32, i32) {
    %c0_i32 = arith.constant 0 : i32
    %c0_i32_0 = arith.constant 0 : i32
    %c0_i32_1 = arith.constant 0 : i32
    return %c0_i32, %c0_i32_0 : i32, i32
  }
  func.func @transform_2(%arg0: i32) -> (i32, i32) {
    %c0_i32 = arith.constant 0 : i32
    %c0_i32_0 = arith.constant 0 : i32
    %c0_i32_1 = arith.constant 0 : i32
    return %c0_i32, %c0_i32_0 : i32, i32
  }
  func.func @transform_3(%arg0: i32) -> (i32, i32, i32) {
    %c0_i32 = arith.constant 0 : i32
    %c0_i32_0 = arith.constant 0 : i32
    %c0_i32_1 = arith.constant 0 : i32
    return %arg0, %c0_i32, %c0_i32_0 : i32, i32, i32
  }
  func.func @transform_4(%arg0: i32) -> (i32, i32, i32) {
    %c0_i32 = arith.constant 0 : i32
    %c0_i32_0 = arith.constant 0 : i32
    %c0_i32_1 = arith.constant 0 : i32
    return %arg0, %c0_i32, %c0_i32_0 : i32, i32, i32
  }
}

</mosaic_0001>

<llo_original>
// kernel: tpu_custom_call.1
$region0: #{tpu_custom_call.1}
  #allocation0 [shape = 'u32[]', space=smem, size = 0x4, offset = 0x4, fixed_abs, tag = 'smem constant byte address 0x4 - core index']
  #allocation1 [shape = 'u32[144,128]{1,0:T(1,128)}', space=vmem, size = 0x12000, scoped, tag = 'internal scratch']
  %s0 = inlined_call_operand.vmem [shape: f32[2,18,18,4], index: 0, kind: input, shape index: {}]
  %s1 = inlined_call_operand.vmem [shape: f32[36,4], index: 1, kind: input, shape index: {}]
  %s2 = inlined_call_operand.vmem [shape: f32[1,4], index: 2, kind: input, shape index: {}]
  %s3 = inlined_call_operand.vmem [shape: f32[2,256,4], index: 3, kind: output, shape index: {0}]
  %s4 = inlined_call_operand.hbm [shape: f32[2,2,4], index: 4, kind: output, shape index: {1}]
  %5 = xla_tuple %s3, %s4
  %s6 = sld [smem:[#allocation0]]
  $region53: #{tpu_custom_call.1} parent=0
    _
  %s8 = ssub.s32 1, %s6
  %s9 = scalar_select 0, %s8, %s6
  $region1: #{tpu_custom_call.1} parent=0
    #allocation2 [shape = 'u8[2048]{0}', space=vmem, size = 0x800, scoped, tag = 'output window, operand 1']
    #allocation3 [shape = 's32[2]{0}', space=sflag, size = 0x8, scoped, tag = 'scoped memory for tpu_custom_call.1']
    %10 = vsyncpa [#allocation3], 0
    %s11 = scalar_lea.sflag [#allocation3], 1
    %12 = vsyncpa %s11, 0
    loop: start=0, step=1, limit=4
    $region2: #{tpu_custom_call.1} parent=1 // loop_pre_header
      _
    $region3: #{tpu_custom_call.1} parent=1 // loop_header
      %s14 = sphi 0, %s18
      %p15 = scmp.ge.s32.totalorder %s14, 4
      %s24 = sphi 0, %s26
      %s27 = sphi 0, %s24
      %s28 = sphi 0, %s27
      %s44 = sphi 0, %s28
      %s48 = sphi 0, %s48
      %s50 = sphi 0, %s48
      %s51 = sphi 0, %s50
      %s65 = sphi 0, %s51
      %s69 = sphi 0, %s69
      %s71 = sphi 0, %s69
      %s72 = sphi 0, %s71
      %s86 = sphi 0, %s72
      %s92 = sphi 0, %s94
      %s95 = sphi 0, %s92
      %s96 = sphi 0, %s95
      %s112 = sphi 0, %s96
      %s118 = sphi 0, %s120
      %s121 = sphi 0, %s118
      %s122 = sphi 0, %s121
      %s138 = sphi 0, %s122
    $region4: #{tpu_custom_call.1} parent=1 // loop_header_branch
      %17 = sbr.rel (%p15) target = $region8
    $region5: #{tpu_custom_call.1} parent=1 // loop_body
      %s19 = ssub.s32 %s14, 1
      %s20 = ssub.s32 %s14, 2
      %s21 = sadd.s32 %s14, 1
      %s22 = ssub.s32 %s14, %s21
      %p23 = scmp.eq.s32.totalorder %s22, 0
      %s25 = sadd.s32 %s24, 1
      %s26 = scalar_select %p23, %s24, %s25
      %p29 = pneg %p23
      %p30 = scmp.eq.s32.totalorder %s14, 1
      %p31 = por %p29, %p30
      %p32 = scmp.ne.s32.totalorder %s24, %s27
      %p33 = scmp.eq.s32.totalorder %s14, 0
      %p34 = por %p32, %p33
      %p35 = scmp.ne.s32.totalorder %s24, %s27
      %p36 = scmp.eq.s32.totalorder %s19, 1
      %p37 = por %p35, %p36
      %p38 = scmp.ne.s32.totalorder %s27, %s28
      %p39 = scmp.eq.s32.totalorder %s19, 0
      %p40 = por %p38, %p39
      %p41 = scmp.ne.s32.totalorder %s27, %s28
      %p42 = scmp.eq.s32.totalorder %s20, 1
      %p43 = por %p41, %p42
      %p45 = scmp.ne.s32.totalorder %s28, %s44
      %p46 = scmp.eq.s32.totalorder %s20, 0
      %p47 = por %p45, %p46
      %s49 = sadd.s32 %s48, 1
      %p52 = scmp.eq.s32.totalorder %s14, 1
      %p53 = scmp.ne.s32.totalorder %s48, %s50
      %p54 = scmp.eq.s32.totalorder %s14, 0
      %p55 = por %p53, %p54
      %p56 = scmp.ne.s32.totalorder %s48, %s50
      %p57 = scmp.eq.s32.totalorder %s19, 1
      %p58 = por %p56, %p57
      %p59 = scmp.ne.s32.totalorder %s50, %s51
      %p60 = scmp.eq.s32.totalorder %s19, 0
      %p61 = por %p59, %p60
      %p62 = scmp.ne.s32.totalorder %s50, %s51
      %p63 = scmp.eq.s32.totalorder %s20, 1
      %p64 = por %p62, %p63
      %p66 = scmp.ne.s32.totalorder %s51, %s65
      %p67 = scmp.eq.s32.totalorder %s20, 0
      %p68 = por %p66, %p67
      %s70 = sadd.s32 %s69, 1
      %p73 = scmp.eq.s32.totalorder %s14, 1
      %p74 = scmp.ne.s32.totalorder %s69, %s71
      %p75 = scmp.eq.s32.totalorder %s14, 0
      %p76 = por %p74, %p75
      %p77 = scmp.ne.s32.totalorder %s69, %s71
      %p78 = scmp.eq.s32.totalorder %s19, 1
      %p79 = por %p77, %p78
      %p80 = scmp.ne.s32.totalorder %s71, %s72
      %p81 = scmp.eq.s32.totalorder %s19, 0
      %p82 = por %p80, %p81
      %p83 = scmp.ne.s32.totalorder %s71, %s72
      %p84 = scmp.eq.s32.totalorder %s20, 1
      %p85 = por %p83, %p84
      %p87 = scmp.ne.s32.totalorder %s72, %s86
      %p88 = scmp.eq.s32.totalorder %s20, 0
      %p89 = por %p87, %p88
      %s90 = ssub.s32 %s14, %s21
      %p91 = scmp.eq.s32.totalorder %s90, 0
      %s93 = sadd.s32 %s92, 1
      %s94 = scalar_select %p91, %s92, %s93
      %p97 = pneg %p91
      %p98 = scmp.eq.s32.totalorder %s14, 1
      %p99 = por %p97, %p98
      %p100 = scmp.ne.s32.totalorder %s92, %s95
      %p101 = scmp.eq.s32.totalorder %s14, 0
      %p102 = por %p100, %p101
      %p103 = scmp.ne.s32.totalorder %s92, %s95
      %p104 = scmp.eq.s32.totalorder %s19, 1
      %p105 = por %p103, %p104
      %p106 = scmp.ne.s32.totalorder %s95, %s96
      %p107 = scmp.eq.s32.totalorder %s19, 0
      %p108 = por %p106, %p107
      %p109 = scmp.ne.s32.totalorder %s95, %s96
      %p110 = scmp.eq.s32.totalorder %s20, 1
      %p111 = por %p109, %p110
      %p113 = scmp.ne.s32.totalorder %s96, %s112
      %p114 = scmp.eq.s32.totalorder %s20, 0
      %p115 = por %p113, %p114
      %s116 = ssub.s32 %s14, %s21
      %p117 = scmp.eq.s32.totalorder %s116, 0
      %s119 = sadd.s32 %s118, 1
      %s120 = scalar_select %p117, %s118, %s119
      %p123 = pneg %p117
      %p124 = scmp.eq.s32.totalorder %s14, 1
      %p125 = por %p123, %p124
      %p126 = scmp.ne.s32.totalorder %s118, %s121
      %p127 = scmp.eq.s32.totalorder %s14, 0
      %p128 = por %p126, %p127
      %p129 = scmp.ne.s32.totalorder %s118, %s121
      %p130 = scmp.eq.s32.totalorder %s19, 1
      %p131 = por %p129, %p130
      %p132 = scmp.ne.s32.totalorder %s121, %s122
      %p133 = scmp.eq.s32.totalorder %s19, 0
      %p134 = por %p132, %p133
      %p135 = scmp.ne.s32.totalorder %s121, %s122
      %p136 = scmp.eq.s32.totalorder %s20, 1
      %p137 = por %p135, %p136
      %p139 = scmp.ne.s32.totalorder %s122, %s138
      %p140 = scmp.eq.s32.totalorder %s20, 0
      %p141 = por %p139, %p140
      %p142 = scmp.le.s32.totalorder 1, %s14
      %p143 = scmp.lt.s32.totalorder %s14, 3
      %p144 = pnand %p142, %p143
      %p145 = pneg %p144
      // Predicated region
      $region9: #{tpu_custom_call.1} parent=5 // pred_check
        _
      $region10: #{tpu_custom_call.1} parent=5 // pred_check_branch
        %147 = sbr.rel (%p144) target = $region12
      $region11: #{tpu_custom_call.1} parent=5 // pred_region
        %s148 = ssub.s32 %s14, 1
        // Predicated region
        $region13: #{tpu_custom_call.1} parent=11 // pred_check
          %p149 = pneg %p61
        $region14: #{tpu_custom_call.1} parent=11 // pred_check_branch
          %151 = sbr.rel (%p149) target = $region16
        $region15: #{tpu_custom_call.1} parent=11 // pred_region
          _
        $region16: #{tpu_custom_call.1} parent=11 // pred_fallthru
          _
        // Predicated region
        $region17: #{tpu_custom_call.1} parent=11 // pred_check
          %p152 = pneg %p82
        $region18: #{tpu_custom_call.1} parent=11 // pred_check_branch
          %154 = sbr.rel (%p152) target = $region20
        $region19: #{tpu_custom_call.1} parent=11 // pred_region
          _
        $region20: #{tpu_custom_call.1} parent=11 // pred_fallthru
          _
      $region12: #{tpu_custom_call.1} parent=5 // pred_fallthru
        _
      %p155 = scmp.lt.s32.totalorder %s14, 2
      // Predicated region
      $region21: #{tpu_custom_call.1} parent=5 // pred_check
        %p156 = pneg %p155
      $region22: #{tpu_custom_call.1} parent=5 // pred_check_branch
        %158 = sbr.rel (%p156) target = $region24
      $region23: #{tpu_custom_call.1} parent=5 // pred_region
        // Predicated region
        $region25: #{tpu_custom_call.1} parent=23 // pred_check
          %p159 = pneg %p34
        $region26: #{tpu_custom_call.1} parent=23 // pred_check_branch
          %161 = sbr.rel (%p159) target = $region28
        $region27: #{tpu_custom_call.1} parent=23 // pred_region
          %p162 = scmp.lt.s32.totalorder %s14, 1
          %s163 = scalar_select %p162, %s14, 1
          %s164 = smul.addr %s163, 54
          %s165 = smul.addr %s164, 8
          %s166 = scalar_lea.vmem %s0, %s165
        $region28: #{tpu_custom_call.1} parent=23 // pred_fallthru
          _
      $region24: #{tpu_custom_call.1} parent=5 // pred_fallthru
        _
      %p167 = scmp.le.s32.totalorder 1, %s14
      %p168 = scmp.lt.s32.totalorder %s14, 3
      %p169 = pnand %p167, %p168
      %p170 = pneg %p169
      // Predicated region
      $region29: #{tpu_custom_call.1} parent=5 // pred_check
        _
      $region30: #{tpu_custom_call.1} parent=5 // pred_check_branch
        %172 = sbr.rel (%p169) target = $region32
      $region31: #{tpu_custom_call.1} parent=5 // pred_region
        %s173 = ssub.s32 %s14, 1
        %p174 = scmp.lt.s32.totalorder %s19, 1
        %s175 = scalar_select %p174, %s19, 1
        %s176 = smul.addr %s175, 54
        %s177 = smul.addr %s176, 8
        %s178 = scalar_lea.vmem %s0, %s177
        %p179 = pneg %p40
        %p180 = pneg %p37
        %p181 = pneg %p61
        %p182 = pneg %p58
        %p183 = pneg %p82
        %p184 = pneg %p79
        %p185 = pneg %p108
        %p186 = pneg %p105
        %p187 = scmp.lt.s32.totalorder %s19, 1
        %s188 = scalar_select %p187, %s19, 1
        %s189 = smul.addr %s188, 32
        %s190 = smul.addr %s189, 8
        %s191 = scalar_lea.vmem %s3, %s190
        %p192 = pneg %p134
        %p193 = pneg %p131
        %s194 = sand.u32 %s121, 1
        %s195 = scalar_lea.sflag [#allocation3], %s194
        %s196 = sand.u32 %s121, 1
        %s197 = smul.addr %s196, 2
        %s198 = scalar_lea.vmem [#allocation2], %s197
        %p199 = scmp.lt.s32.totalorder %s19, 1
        %s200 = scalar_select %p199, %s19, 1
        %s201 = smul.addr %s200, 54
        %s202 = smul.addr %s201, 8
        %s203 = scalar_lea.vmem %s0, %s202
        %p204 = scmp.lt.s32.totalorder %s19, 1
        %s205 = scalar_select %p204, %s19, 1
        %s206 = smul.addr %s205, 32
        %s207 = smul.addr %s206, 8
        %s208 = scalar_lea.vmem %s3, %s207
        %v209 = vld [vmem:[%s203] sm:$0xff]
        %v210 = vld [vmem:[%s203 + $0x8] sm:$0xff]
        %v211 = vld [vmem:[%s203 + $0x10] sm:$0x3]
        %v212 = vld [vmem:[%s203 + $0x18] sm:$0xff]
        %v213 = vld [vmem:[%s203 + $0x20] sm:$0xff]
        %v214 = vld [vmem:[%s203 + $0x28] sm:$0x3]
        %v215 = vld [vmem:[%s203 + $0x30] sm:$0xff]
        %v216 = vld [vmem:[%s203 + $0x38] sm:$0xff]
        %v217 = vld [vmem:[%s203 + $0x40] sm:$0x3]
        %v218 = vld [vmem:[%s203 + $0x48] sm:$0xff]
        %v219 = vld [vmem:[%s203 + $0x50] sm:$0xff]
        %v220 = vld [vmem:[%s203 + $0x58] sm:$0x3]
        %v221 = vld [vmem:[%s203 + $0x60] sm:$0xff]
        %v222 = vld [vmem:[%s203 + $0x68] sm:$0xff]
        %v223 = vld [vmem:[%s203 + $0x70] sm:$0x3]
        %v224 = vld [vmem:[%s203 + $0x78] sm:$0xff]
        %v225 = vld [vmem:[%s203 + $0x80] sm:$0xff]
        %v226 = vld [vmem:[%s203 + $0x88] sm:$0x3]
        %v227 = vld [vmem:[%s203 + $0x90] sm:$0xff]
        %v228 = vld [vmem:[%s203 + $0x98] sm:$0xff]
        %v229 = vld [vmem:[%s203 + $0xa0] sm:$0x3]
        %v230 = vld [vmem:[%s203 + $0xa8] sm:$0xff]
        %v231 = vld [vmem:[%s203 + $0xb0] sm:$0xff]
        %v232 = vld [vmem:[%s203 + $0xb8] sm:$0x3]
        %v233 = vld [vmem:[%s203 + $0xc0] sm:$0xff]
        %v234 = vld [vmem:[%s203 + $0xc8] sm:$0xff]
        %v235 = vld [vmem:[%s203 + $0xd0] sm:$0x3]
        %v236 = vld [vmem:[%s203 + $0xd8] sm:$0xff]
        %v237 = vld [vmem:[%s203 + $0xe0] sm:$0xff]
        %v238 = vld [vmem:[%s203 + $0xe8] sm:$0x3]
        %v239 = vld [vmem:[%s203 + $0xf0] sm:$0xff]
        %v240 = vld [vmem:[%s203 + $0xf8] sm:$0xff]
        %v241 = vld [vmem:[%s203 + $0x100] sm:$0x3]
        %v242 = vld [vmem:[%s203 + $0x108] sm:$0xff]
        %v243 = vld [vmem:[%s203 + $0x110] sm:$0xff]
        %v244 = vld [vmem:[%s203 + $0x118] sm:$0x3]
        %v245 = vld [vmem:[%s203 + $0x120] sm:$0xff]
        %v246 = vld [vmem:[%s203 + $0x128] sm:$0xff]
        %v247 = vld [vmem:[%s203 + $0x130] sm:$0x3]
        %v248 = vld [vmem:[%s203 + $0x138] sm:$0xff]
        %v249 = vld [vmem:[%s203 + $0x140] sm:$0xff]
        %v250 = vld [vmem:[%s203 + $0x148] sm:$0x3]
        %v251 = vld [vmem:[%s203 + $0x150] sm:$0xff]
        %v252 = vld [vmem:[%s203 + $0x158] sm:$0xff]
        %v253 = vld [vmem:[%s203 + $0x160] sm:$0x3]
        %v254 = vld [vmem:[%s203 + $0x168] sm:$0xff]
        %v255 = vld [vmem:[%s203 + $0x170] sm:$0xff]
        %v256 = vld [vmem:[%s203 + $0x178] sm:$0x3]
        %v257 = vld [vmem:[%s203 + $0x180] sm:$0xff]
        %v258 = vld [vmem:[%s203 + $0x188] sm:$0xff]
        %v259 = vld [vmem:[%s203 + $0x190] sm:$0x3]
        %v260 = vld [vmem:[%s203 + $0x198] sm:$0xff]
        %v261 = vld [vmem:[%s203 + $0x1a0] sm:$0xff]
        %v262 = vld [vmem:[%s203 + $0x1a8] sm:$0x3]
        %vm311 = vcmask 1046528
        %v312 = vrot.slane %v209, 1
        %v313 = vrot.slane %v210, 1
        %v314 = vsel %vm311, %v312, %v313
        %v315 = vrot.slane %v211, 1
        %v316 = vsel %vm311, %v313, %v315
        %v317 = vrot.slane %v212, 1
        %v318 = vrot.slane %v213, 1
        %v319 = vsel %vm311, %v317, %v318
        %v320 = vrot.slane %v214, 1
        %v321 = vsel %vm311, %v318, %v320
        %v322 = vrot.slane %v215, 1
        %v323 = vrot.slane %v216, 1
        %v324 = vsel %vm311, %v322, %v323
        %v325 = vrot.slane %v217, 1
        %v326 = vsel %vm311, %v323, %v325
        %v327 = vrot.slane %v218, 1
        %v328 = vrot.slane %v219, 1
        %v329 = vsel %vm311, %v327, %v328
        %v330 = vrot.slane %v220, 1
        %v331 = vsel %vm311, %v328, %v330
        %v332 = vrot.slane %v221, 1
        %v333 = vrot.slane %v222, 1
        %v334 = vsel %vm311, %v332, %v333
        %v335 = vrot.slane %v223, 1
        %v336 = vsel %vm311, %v333, %v335
        %v337 = vrot.slane %v224, 1
        %v338 = vrot.slane %v225, 1
        %v339 = vsel %vm311, %v337, %v338
        %v340 = vrot.slane %v226, 1
        %v341 = vsel %vm311, %v338, %v340
        %v342 = vrot.slane %v227, 1
        %v343 = vrot.slane %v228, 1
        %v344 = vsel %vm311, %v342, %v343
        %v345 = vrot.slane %v229, 1
        %v346 = vsel %vm311, %v343, %v345
        %v347 = vrot.slane %v230, 1
        %v348 = vrot.slane %v231, 1
        %v349 = vsel %vm311, %v347, %v348
        %v350 = vrot.slane %v232, 1
        %v351 = vsel %vm311, %v348, %v350
        %v352 = vrot.slane %v233, 1
        %v353 = vrot.slane %v234, 1
        %v354 = vsel %vm311, %v352, %v353
        %v355 = vrot.slane %v235, 1
        %v356 = vsel %vm311, %v353, %v355
        %v357 = vrot.slane %v236, 1
        %v358 = vrot.slane %v237, 1
        %v359 = vsel %vm311, %v357, %v358
        %v360 = vrot.slane %v238, 1
        %v361 = vsel %vm311, %v358, %v360
        %v362 = vrot.slane %v239, 1
        %v363 = vrot.slane %v240, 1
        %v364 = vsel %vm311, %v362, %v363
        %v365 = vrot.slane %v241, 1
        %v366 = vsel %vm311, %v363, %v365
        %v367 = vrot.slane %v242, 1
        %v368 = vrot.slane %v243, 1
        %v369 = vsel %vm311, %v367, %v368
        %v370 = vrot.slane %v244, 1
        %v371 = vsel %vm311, %v368, %v370
        %v372 = vrot.slane %v245, 1
        %v373 = vrot.slane %v246, 1
        %v374 = vsel %vm311, %v372, %v373
        %v375 = vrot.slane %v247, 1
        %v376 = vsel %vm311, %v373, %v375
        %v377 = vrot.slane %v248, 1
        %v378 = vrot.slane %v249, 1
        %v379 = vsel %vm311, %v377, %v378
        %v380 = vrot.slane %v250, 1
        %v381 = vsel %vm311, %v378, %v380
        %v382 = vrot.slane %v251, 1
        %v383 = vrot.slane %v252, 1
        %v384 = vsel %vm311, %v382, %v383
        %v385 = vrot.slane %v253, 1
        %v386 = vsel %vm311, %v383, %v385
        %v387 = vrot.slane %v254, 1
        %v388 = vrot.slane %v255, 1
        %v389 = vsel %vm311, %v387, %v388
        %v390 = vrot.slane %v256, 1
        %v391 = vsel %vm311, %v388, %v390
        %vm392 = vcmask 1045504
        %v393 = vrot.slane %v209, 2
        %v394 = vrot.slane %v210, 2
        %v395 = vsel %vm392, %v393, %v394
        %v396 = vrot.slane %v211, 2
        %v397 = vsel %vm392, %v394, %v396
        %v398 = vrot.slane %v212, 2
        %v399 = vrot.slane %v213, 2
        %v400 = vsel %vm392, %v398, %v399
        %v401 = vrot.slane %v214, 2
        %v402 = vsel %vm392, %v399, %v401
        %v403 = vrot.slane %v215, 2
        %v404 = vrot.slane %v216, 2
        %v405 = vsel %vm392, %v403, %v404
        %v406 = vrot.slane %v217, 2
        %v407 = vsel %vm392, %v404, %v406
        %v408 = vrot.slane %v218, 2
        %v409 = vrot.slane %v219, 2
        %v410 = vsel %vm392, %v408, %v409
        %v411 = vrot.slane %v220, 2
        %v412 = vsel %vm392, %v409, %v411
        %v413 = vrot.slane %v221, 2
        %v414 = vrot.slane %v222, 2
        %v415 = vsel %vm392, %v413, %v414
        %v416 = vrot.slane %v223, 2
        %v417 = vsel %vm392, %v414, %v416
        %v418 = vrot.slane %v224, 2
        %v419 = vrot.slane %v225, 2
        %v420 = vsel %vm392, %v418, %v419
        %v421 = vrot.slane %v226, 2
        %v422 = vsel %vm392, %v419, %v421
        %v423 = vrot.slane %v227, 2
        %v424 = vrot.slane %v228, 2
        %v425 = vsel %vm392, %v423, %v424
        %v426 = vrot.slane %v229, 2
        %v427 = vsel %vm392, %v424, %v426
        %v428 = vrot.slane %v230, 2
        %v429 = vrot.slane %v231, 2
        %v430 = vsel %vm392, %v428, %v429
        %v431 = vrot.slane %v232, 2
        %v432 = vsel %vm392, %v429, %v431
        %v433 = vrot.slane %v233, 2
        %v434 = vrot.slane %v234, 2
        %v435 = vsel %vm392, %v433, %v434
        %v436 = vrot.slane %v235, 2
        %v437 = vsel %vm392, %v434, %v436
        %v438 = vrot.slane %v236, 2
        %v439 = vrot.slane %v237, 2
        %v440 = vsel %vm392, %v438, %v439
        %v441 = vrot.slane %v238, 2
        %v442 = vsel %vm392, %v439, %v441
        %v443 = vrot.slane %v239, 2
        %v444 = vrot.slane %v240, 2
        %v445 = vsel %vm392, %v443, %v444
        %v446 = vrot.slane %v241, 2
        %v447 = vsel %vm392, %v444, %v446
        %v448 = vrot.slane %v242, 2
        %v449 = vrot.slane %v243, 2
        %v450 = vsel %vm392, %v448, %v449
        %v451 = vrot.slane %v244, 2
        %v452 = vsel %vm392, %v449, %v451
        %v453 = vrot.slane %v245, 2
        %v454 = vrot.slane %v246, 2
        %v455 = vsel %vm392, %v453, %v454
        %v456 = vrot.slane %v247, 2
        %v457 = vsel %vm392, %v454, %v456
        %v458 = vrot.slane %v248, 2
        %v459 = vrot.slane %v249, 2
        %v460 = vsel %vm392, %v458, %v459
        %v461 = vrot.slane %v250, 2
        %v462 = vsel %vm392, %v459, %v461
        %v463 = vrot.slane %v251, 2
        %v464 = vrot.slane %v252, 2
        %v465 = vsel %vm392, %v463, %v464
        %v466 = vrot.slane %v253, 2
        %v467 = vsel %vm392, %v464, %v466
        %v468 = vrot.slane %v254, 2
        %v469 = vrot.slane %v255, 2
        %v470 = vsel %vm392, %v468, %v469
        %v471 = vrot.slane %v256, 2
        %v472 = vsel %vm392, %v469, %v471
        %v476 = vrot.slane %v257, 1
        %v477 = vrot.slane %v258, 1
        %v478 = vsel %vm311, %v476, %v477
        %v479 = vrot.slane %v259, 1
        %v480 = vsel %vm311, %v477, %v479
        %v481 = vrot.slane %v257, 2
        %v482 = vrot.slane %v258, 2
        %v483 = vsel %vm392, %v481, %v482
        %v484 = vrot.slane %v259, 2
        %v485 = vsel %vm392, %v482, %v484
        %v489 = vrot.slane %v260, 1
        %v490 = vrot.slane %v261, 1
        %v491 = vsel %vm311, %v489, %v490
        %v492 = vrot.slane %v262, 1
        %v493 = vsel %vm311, %v490, %v492
        %v494 = vrot.slane %v260, 2
        %v495 = vrot.slane %v261, 2
        %v496 = vsel %vm392, %v494, %v495
        %v497 = vrot.slane %v262, 2
        %v498 = vsel %vm392, %v495, %v497
        %499 = vrot.lane.b32.xlu0 %v314, 4
        %v500 = vpop.permute.xlu0 %499
        %501 = vrot.lane.b32.xlu0 %v316, 4
        %v502 = vpop.permute.xlu0 %501
        %503 = vrot.lane.b32.xlu0 %v319, 4
        %v504 = vpop.permute.xlu0 %503
        %505 = vrot.lane.b32.xlu0 %v321, 4
        %v506 = vpop.permute.xlu0 %505
        %507 = vrot.lane.b32.xlu0 %v324, 4
        %v508 = vpop.permute.xlu0 %507
        %509 = vrot.lane.b32.xlu0 %v326, 4
        %v510 = vpop.permute.xlu0 %509
        %511 = vrot.lane.b32.xlu0 %v329, 4
        %v512 = vpop.permute.xlu0 %511
        %513 = vrot.lane.b32.xlu0 %v331, 4
        %v514 = vpop.permute.xlu0 %513
        %515 = vrot.lane.b32.xlu0 %v334, 4
        %v516 = vpop.permute.xlu0 %515
        %517 = vrot.lane.b32.xlu0 %v336, 4
        %v518 = vpop.permute.xlu0 %517
        %519 = vrot.lane.b32.xlu0 %v339, 4
        %v520 = vpop.permute.xlu0 %519
        %521 = vrot.lane.b32.xlu0 %v341, 4
        %v522 = vpop.permute.xlu0 %521
        %523 = vrot.lane.b32.xlu0 %v344, 4
        %v524 = vpop.permute.xlu0 %523
        %525 = vrot.lane.b32.xlu0 %v346, 4
        %v526 = vpop.permute.xlu0 %525
        %527 = vrot.lane.b32.xlu0 %v349, 4
        %v528 = vpop.permute.xlu0 %527
        %529 = vrot.lane.b32.xlu0 %v351, 4
        %v530 = vpop.permute.xlu0 %529
        %531 = vrot.lane.b32.xlu0 %v354, 4
        %v532 = vpop.permute.xlu0 %531
        %533 = vrot.lane.b32.xlu0 %v356, 4
        %v534 = vpop.permute.xlu0 %533
        %535 = vrot.lane.b32.xlu0 %v359, 4
        %v536 = vpop.permute.xlu0 %535
        %537 = vrot.lane.b32.xlu0 %v361, 4
        %v538 = vpop.permute.xlu0 %537
        %539 = vrot.lane.b32.xlu0 %v364, 4
        %v540 = vpop.permute.xlu0 %539
        %541 = vrot.lane.b32.xlu0 %v366, 4
        %v542 = vpop.permute.xlu0 %541
        %543 = vrot.lane.b32.xlu0 %v369, 4
        %v544 = vpop.permute.xlu0 %543
        %545 = vrot.lane.b32.xlu0 %v371, 4
        %v546 = vpop.permute.xlu0 %545
        %547 = vrot.lane.b32.xlu0 %v374, 4
        %v548 = vpop.permute.xlu0 %547
        %549 = vrot.lane.b32.xlu0 %v376, 4
        %v550 = vpop.permute.xlu0 %549
        %551 = vrot.lane.b32.xlu0 %v379, 4
        %v552 = vpop.permute.xlu0 %551
        %553 = vrot.lane.b32.xlu0 %v381, 4
        %v554 = vpop.permute.xlu0 %553
        %555 = vrot.lane.b32.xlu0 %v384, 4
        %v556 = vpop.permute.xlu0 %555
        %557 = vrot.lane.b32.xlu0 %v386, 4
        %v558 = vpop.permute.xlu0 %557
        %559 = vrot.lane.b32.xlu0 %v389, 4
        %v560 = vpop.permute.xlu0 %559
        %561 = vrot.lane.b32.xlu0 %v391, 4
        %v562 = vpop.permute.xlu0 %561
        %595 = vrot.lane.b32.xlu0 %v395, 8
        %v596 = vpop.permute.xlu0 %595
        %597 = vrot.lane.b32.xlu0 %v397, 8
        %v598 = vpop.permute.xlu0 %597
        %599 = vrot.lane.b32.xlu0 %v400, 8
        %v600 = vpop.permute.xlu0 %599
        %601 = vrot.lane.b32.xlu0 %v402, 8
        %v602 = vpop.permute.xlu0 %601
        %603 = vrot.lane.b32.xlu0 %v405, 8
        %v604 = vpop.permute.xlu0 %603
        %605 = vrot.lane.b32.xlu0 %v407, 8
        %v606 = vpop.permute.xlu0 %605
        %607 = vrot.lane.b32.xlu0 %v410, 8
        %v608 = vpop.permute.xlu0 %607
        %609 = vrot.lane.b32.xlu0 %v412, 8
        %v610 = vpop.permute.xlu0 %609
        %611 = vrot.lane.b32.xlu0 %v415, 8
        %v612 = vpop.permute.xlu0 %611
        %613 = vrot.lane.b32.xlu0 %v417, 8
        %v614 = vpop.permute.xlu0 %613
        %615 = vrot.lane.b32.xlu0 %v420, 8
        %v616 = vpop.permute.xlu0 %615
        %617 = vrot.lane.b32.xlu0 %v422, 8
        %v618 = vpop.permute.xlu0 %617
        %619 = vrot.lane.b32.xlu0 %v425, 8
        %v620 = vpop.permute.xlu0 %619
        %621 = vrot.lane.b32.xlu0 %v427, 8
        %v622 = vpop.permute.xlu0 %621
        %623 = vrot.lane.b32.xlu0 %v430, 8
        %v624 = vpop.permute.xlu0 %623
        %625 = vrot.lane.b32.xlu0 %v432, 8
        %v626 = vpop.permute.xlu0 %625
        %627 = vrot.lane.b32.xlu0 %v435, 8
        %v628 = vpop.permute.xlu0 %627
        %629 = vrot.lane.b32.xlu0 %v437, 8
        %v630 = vpop.permute.xlu0 %629
        %631 = vrot.lane.b32.xlu0 %v440, 8
        %v632 = vpop.permute.xlu0 %631
        %633 = vrot.lane.b32.xlu0 %v442, 8
        %v634 = vpop.permute.xlu0 %633
        %635 = vrot.lane.b32.xlu0 %v445, 8
        %v636 = vpop.permute.xlu0 %635
        %637 = vrot.lane.b32.xlu0 %v447, 8
        %v638 = vpop.permute.xlu0 %637
        %639 = vrot.lane.b32.xlu0 %v450, 8
        %v640 = vpop.permute.xlu0 %639
        %641 = vrot.lane.b32.xlu0 %v452, 8
        %v642 = vpop.permute.xlu0 %641
        %643 = vrot.lane.b32.xlu0 %v455, 8
        %v644 = vpop.permute.xlu0 %643
        %645 = vrot.lane.b32.xlu0 %v457, 8
        %v646 = vpop.permute.xlu0 %645
        %647 = vrot.lane.b32.xlu0 %v460, 8
        %v648 = vpop.permute.xlu0 %647
        %649 = vrot.lane.b32.xlu0 %v462, 8
        %v650 = vpop.permute.xlu0 %649
        %651 = vrot.lane.b32.xlu0 %v465, 8
        %v652 = vpop.permute.xlu0 %651
        %653 = vrot.lane.b32.xlu0 %v467, 8
        %v654 = vpop.permute.xlu0 %653
        %655 = vrot.lane.b32.xlu0 %v470, 8
        %v656 = vpop.permute.xlu0 %655
        %657 = vrot.lane.b32.xlu0 %v472, 8
        %v658 = vpop.permute.xlu0 %657
        %691 = vrot.lane.b32.xlu0 %v212, 12
        %v692 = vpop.permute.xlu0 %691
        %693 = vrot.lane.b32.xlu0 %v213, 12
        %v694 = vpop.permute.xlu0 %693
        %695 = vrot.lane.b32.xlu0 %v215, 12
        %v696 = vpop.permute.xlu0 %695
        %697 = vrot.lane.b32.xlu0 %v216, 12
        %v698 = vpop.permute.xlu0 %697
        %699 = vrot.lane.b32.xlu0 %v218, 12
        %v700 = vpop.permute.xlu0 %699
        %701 = vrot.lane.b32.xlu0 %v219, 12
        %v702 = vpop.permute.xlu0 %701
        %703 = vrot.lane.b32.xlu0 %v221, 12
        %v704 = vpop.permute.xlu0 %703
        %705 = vrot.lane.b32.xlu0 %v222, 12
        %v706 = vpop.permute.xlu0 %705
        %707 = vrot.lane.b32.xlu0 %v224, 12
        %v708 = vpop.permute.xlu0 %707
        %709 = vrot.lane.b32.xlu0 %v225, 12
        %v710 = vpop.permute.xlu0 %709
        %711 = vrot.lane.b32.xlu0 %v227, 12
        %v712 = vpop.permute.xlu0 %711
        %713 = vrot.lane.b32.xlu0 %v228, 12
        %v714 = vpop.permute.xlu0 %713
        %715 = vrot.lane.b32.xlu0 %v230, 12
        %v716 = vpop.permute.xlu0 %715
        %717 = vrot.lane.b32.xlu0 %v231, 12
        %v718 = vpop.permute.xlu0 %717
        %719 = vrot.lane.b32.xlu0 %v233, 12
        %v720 = vpop.permute.xlu0 %719
        %721 = vrot.lane.b32.xlu0 %v234, 12
        %v722 = vpop.permute.xlu0 %721
        %723 = vrot.lane.b32.xlu0 %v236, 12
        %v724 = vpop.permute.xlu0 %723
        %725 = vrot.lane.b32.xlu0 %v237, 12
        %v726 = vpop.permute.xlu0 %725
        %727 = vrot.lane.b32.xlu0 %v239, 12
        %v728 = vpop.permute.xlu0 %727
        %729 = vrot.lane.b32.xlu0 %v240, 12
        %v730 = vpop.permute.xlu0 %729
        %731 = vrot.lane.b32.xlu0 %v242, 12
        %v732 = vpop.permute.xlu0 %731
        %733 = vrot.lane.b32.xlu0 %v243, 12
        %v734 = vpop.permute.xlu0 %733
        %735 = vrot.lane.b32.xlu0 %v245, 12
        %v736 = vpop.permute.xlu0 %735
        %737 = vrot.lane.b32.xlu0 %v246, 12
        %v738 = vpop.permute.xlu0 %737
        %739 = vrot.lane.b32.xlu0 %v248, 12
        %v740 = vpop.permute.xlu0 %739
        %741 = vrot.lane.b32.xlu0 %v249, 12
        %v742 = vpop.permute.xlu0 %741
        %743 = vrot.lane.b32.xlu0 %v251, 12
        %v744 = vpop.permute.xlu0 %743
        %745 = vrot.lane.b32.xlu0 %v252, 12
        %v746 = vpop.permute.xlu0 %745
        %747 = vrot.lane.b32.xlu0 %v254, 12
        %v748 = vpop.permute.xlu0 %747
        %749 = vrot.lane.b32.xlu0 %v255, 12
        %v750 = vpop.permute.xlu0 %749
        %751 = vrot.lane.b32.xlu0 %v257, 12
        %v752 = vpop.permute.xlu0 %751
        %753 = vrot.lane.b32.xlu0 %v258, 12
        %v754 = vpop.permute.xlu0 %753
        %787 = vrot.lane.b32.xlu0 %v319, 16
        %v788 = vpop.permute.xlu0 %787
        %789 = vrot.lane.b32.xlu0 %v321, 16
        %v790 = vpop.permute.xlu0 %789
        %791 = vrot.lane.b32.xlu0 %v324, 16
        %v792 = vpop.permute.xlu0 %791
        %793 = vrot.lane.b32.xlu0 %v326, 16
        %v794 = vpop.permute.xlu0 %793
        %795 = vrot.lane.b32.xlu0 %v329, 16
        %v796 = vpop.permute.xlu0 %795
        %797 = vrot.lane.b32.xlu0 %v331, 16
        %v798 = vpop.permute.xlu0 %797
        %799 = vrot.lane.b32.xlu0 %v334, 16
        %v800 = vpop.permute.xlu0 %799
        %801 = vrot.lane.b32.xlu0 %v336, 16
        %v802 = vpop.permute.xlu0 %801
        %803 = vrot.lane.b32.xlu0 %v339, 16
        %v804 = vpop.permute.xlu0 %803
        %805 = vrot.lane.b32.xlu0 %v341, 16
        %v806 = vpop.permute.xlu0 %805
        %807 = vrot.lane.b32.xlu0 %v344, 16
        %v808 = vpop.permute.xlu0 %807
        %809 = vrot.lane.b32.xlu0 %v346, 16
        %v810 = vpop.permute.xlu0 %809
        %811 = vrot.lane.b32.xlu0 %v349, 16
        %v812 = vpop.permute.xlu0 %811
        %813 = vrot.lane.b32.xlu0 %v351, 16
        %v814 = vpop.permute.xlu0 %813
        %815 = vrot.lane.b32.xlu0 %v354, 16
        %v816 = vpop.permute.xlu0 %815
        %817 = vrot.lane.b32.xlu0 %v356, 16
        %v818 = vpop.permute.xlu0 %817
        %819 = vrot.lane.b32.xlu0 %v359, 16
        %v820 = vpop.permute.xlu0 %819
        %821 = vrot.lane.b32.xlu0 %v361, 16
        %v822 = vpop.permute.xlu0 %821
        %823 = vrot.lane.b32.xlu0 %v364, 16
        %v824 = vpop.permute.xlu0 %823
        %825 = vrot.lane.b32.xlu0 %v366, 16
        %v826 = vpop.permute.xlu0 %825
        %827 = vrot.lane.b32.xlu0 %v369, 16
        %v828 = vpop.permute.xlu0 %827
        %829 = vrot.lane.b32.xlu0 %v371, 16
        %v830 = vpop.permute.xlu0 %829
        %831 = vrot.lane.b32.xlu0 %v374, 16
        %v832 = vpop.permute.xlu0 %831
        %833 = vrot.lane.b32.xlu0 %v376, 16
        %v834 = vpop.permute.xlu0 %833
        %835 = vrot.lane.b32.xlu0 %v379, 16
        %v836 = vpop.permute.xlu0 %835
        %837 = vrot.lane.b32.xlu0 %v381, 16
        %v838 = vpop.permute.xlu0 %837
        %839 = vrot.lane.b32.xlu0 %v384, 16
        %v840 = vpop.permute.xlu0 %839
        %841 = vrot.lane.b32.xlu0 %v386, 16
        %v842 = vpop.permute.xlu0 %841
        %843 = vrot.lane.b32.xlu0 %v389, 16
        %v844 = vpop.permute.xlu0 %843
        %845 = vrot.lane.b32.xlu0 %v391, 16
        %v846 = vpop.permute.xlu0 %845
        %847 = vrot.lane.b32.xlu0 %v478, 16
        %v848 = vpop.permute.xlu0 %847
        %849 = vrot.lane.b32.xlu0 %v480, 16
        %v850 = vpop.permute.xlu0 %849
        %883 = vrot.lane.b32.xlu0 %v400, 20
        %v884 = vpop.permute.xlu0 %883
        %885 = vrot.lane.b32.xlu0 %v402, 20
        %v886 = vpop.permute.xlu0 %885
        %887 = vrot.lane.b32.xlu0 %v405, 20
        %v888 = vpop.permute.xlu0 %887
        %889 = vrot.lane.b32.xlu0 %v407, 20
        %v890 = vpop.permute.xlu0 %889
        %891 = vrot.lane.b32.xlu0 %v410, 20
        %v892 = vpop.permute.xlu0 %891
        %893 = vrot.lane.b32.xlu0 %v412, 20
        %v894 = vpop.permute.xlu0 %893
        %895 = vrot.lane.b32.xlu0 %v415, 20
        %v896 = vpop.permute.xlu0 %895
        %897 = vrot.lane.b32.xlu0 %v417, 20
        %v898 = vpop.permute.xlu0 %897
        %899 = vrot.lane.b32.xlu0 %v420, 20
        %v900 = vpop.permute.xlu0 %899
        %901 = vrot.lane.b32.xlu0 %v422, 20
        %v902 = vpop.permute.xlu0 %901
        %903 = vrot.lane.b32.xlu0 %v425, 20
        %v904 = vpop.permute.xlu0 %903
        %905 = vrot.lane.b32.xlu0 %v427, 20
        %v906 = vpop.permute.xlu0 %905
        %907 = vrot.lane.b32.xlu0 %v430, 20
        %v908 = vpop.permute.xlu0 %907
        %909 = vrot.lane.b32.xlu0 %v432, 20
        %v910 = vpop.permute.xlu0 %909
        %911 = vrot.lane.b32.xlu0 %v435, 20
        %v912 = vpop.permute.xlu0 %911
        %913 = vrot.lane.b32.xlu0 %v437, 20
        %v914 = vpop.permute.xlu0 %913
        %915 = vrot.lane.b32.xlu0 %v440, 20
        %v916 = vpop.permute.xlu0 %915
        %917 = vrot.lane.b32.xlu0 %v442, 20
        %v918 = vpop.permute.xlu0 %917
        %919 = vrot.lane.b32.xlu0 %v445, 20
        %v920 = vpop.permute.xlu0 %919
        %921 = vrot.lane.b32.xlu0 %v447, 20
        %v922 = vpop.permute.xlu0 %921
        %923 = vrot.lane.b32.xlu0 %v450, 20
        %v924 = vpop.permute.xlu0 %923
        %925 = vrot.lane.b32.xlu0 %v452, 20
        %v926 = vpop.permute.xlu0 %925
        %927 = vrot.lane.b32.xlu0 %v455, 20
        %v928 = vpop.permute.xlu0 %927
        %929 = vrot.lane.b32.xlu0 %v457, 20
        %v930 = vpop.permute.xlu0 %929
        %931 = vrot.lane.b32.xlu0 %v460, 20
        %v932 = vpop.permute.xlu0 %931
        %933 = vrot.lane.b32.xlu0 %v462, 20
        %v934 = vpop.permute.xlu0 %933
        %935 = vrot.lane.b32.xlu0 %v465, 20
        %v936 = vpop.permute.xlu0 %935
        %937 = vrot.lane.b32.xlu0 %v467, 20
        %v938 = vpop.permute.xlu0 %937
        %939 = vrot.lane.b32.xlu0 %v470, 20
        %v940 = vpop.permute.xlu0 %939
        %941 = vrot.lane.b32.xlu0 %v472, 20
        %v942 = vpop.permute.xlu0 %941
        %943 = vrot.lane.b32.xlu0 %v483, 20
        %v944 = vpop.permute.xlu0 %943
        %945 = vrot.lane.b32.xlu0 %v485, 20
        %v946 = vpop.permute.xlu0 %945
        %979 = vrot.lane.b32.xlu0 %v215, 24
        %v980 = vpop.permute.xlu0 %979
        %981 = vrot.lane.b32.xlu0 %v216, 24
        %v982 = vpop.permute.xlu0 %981
        %983 = vrot.lane.b32.xlu0 %v218, 24
        %v984 = vpop.permute.xlu0 %983
        %985 = vrot.lane.b32.xlu0 %v219, 24
        %v986 = vpop.permute.xlu0 %985
        %987 = vrot.lane.b32.xlu0 %v221, 24
        %v988 = vpop.permute.xlu0 %987
        %989 = vrot.lane.b32.xlu0 %v222, 24
        %v990 = vpop.permute.xlu0 %989
        %991 = vrot.lane.b32.xlu0 %v224, 24
        %v992 = vpop.permute.xlu0 %991
        %993 = vrot.lane.b32.xlu0 %v225, 24
        %v994 = vpop.permute.xlu0 %993
        %995 = vrot.lane.b32.xlu0 %v227, 24
        %v996 = vpop.permute.xlu0 %995
        %997 = vrot.lane.b32.xlu0 %v228, 24
        %v998 = vpop.permute.xlu0 %997
        %999 = vrot.lane.b32.xlu0 %v230, 24
        %v1000 = vpop.permute.xlu0 %999
        %1001 = vrot.lane.b32.xlu0 %v231, 24
        %v1002 = vpop.permute.xlu0 %1001
        %1003 = vrot.lane.b32.xlu0 %v233, 24
        %v1004 = vpop.permute.xlu0 %1003
        %1005 = vrot.lane.b32.xlu0 %v234, 24
        %v1006 = vpop.permute.xlu0 %1005
        %1007 = vrot.lane.b32.xlu0 %v236, 24
        %v1008 = vpop.permute.xlu0 %1007
        %1009 = vrot.lane.b32.xlu0 %v237, 24
        %v1010 = vpop.permute.xlu0 %1009
        %1011 = vrot.lane.b32.xlu0 %v239, 24
        %v1012 = vpop.permute.xlu0 %1011
        %1013 = vrot.lane.b32.xlu0 %v240, 24
        %v1014 = vpop.permute.xlu0 %1013
        %1015 = vrot.lane.b32.xlu0 %v242, 24
        %v1016 = vpop.permute.xlu0 %1015
        %1017 = vrot.lane.b32.xlu0 %v243, 24
        %v1018 = vpop.permute.xlu0 %1017
        %1019 = vrot.lane.b32.xlu0 %v245, 24
        %v1020 = vpop.permute.xlu0 %1019
        %1021 = vrot.lane.b32.xlu0 %v246, 24
        %v1022 = vpop.permute.xlu0 %1021
        %1023 = vrot.lane.b32.xlu0 %v248, 24
        %v1024 = vpop.permute.xlu0 %1023
        %1025 = vrot.lane.b32.xlu0 %v249, 24
        %v1026 = vpop.permute.xlu0 %1025
        %1027 = vrot.lane.b32.xlu0 %v251, 24
        %v1028 = vpop.permute.xlu0 %1027
        %1029 = vrot.lane.b32.xlu0 %v252, 24
        %v1030 = vpop.permute.xlu0 %1029
        %1031 = vrot.lane.b32.xlu0 %v254, 24
        %v1032 = vpop.permute.xlu0 %1031
        %1033 = vrot.lane.b32.xlu0 %v255, 24
        %v1034 = vpop.permute.xlu0 %1033
        %1035 = vrot.lane.b32.xlu0 %v257, 24
        %v1036 = vpop.permute.xlu0 %1035
        %1037 = vrot.lane.b32.xlu0 %v258, 24
        %v1038 = vpop.permute.xlu0 %1037
        %1039 = vrot.lane.b32.xlu0 %v260, 24
        %v1040 = vpop.permute.xlu0 %1039
        %1041 = vrot.lane.b32.xlu0 %v261, 24
        %v1042 = vpop.permute.xlu0 %1041
        %1075 = vrot.lane.b32.xlu0 %v324, 28
        %v1076 = vpop.permute.xlu0 %1075
        %1077 = vrot.lane.b32.xlu0 %v326, 28
        %v1078 = vpop.permute.xlu0 %1077
        %1079 = vrot.lane.b32.xlu0 %v329, 28
        %v1080 = vpop.permute.xlu0 %1079
        %1081 = vrot.lane.b32.xlu0 %v331, 28
        %v1082 = vpop.permute.xlu0 %1081
        %1083 = vrot.lane.b32.xlu0 %v334, 28
        %v1084 = vpop.permute.xlu0 %1083
        %1085 = vrot.lane.b32.xlu0 %v336, 28
        %v1086 = vpop.permute.xlu0 %1085
        %1087 = vrot.lane.b32.xlu0 %v339, 28
        %v1088 = vpop.permute.xlu0 %1087
        %1089 = vrot.lane.b32.xlu0 %v341, 28
        %v1090 = vpop.permute.xlu0 %1089
        %1091 = vrot.lane.b32.xlu0 %v344, 28
        %v1092 = vpop.permute.xlu0 %1091
        %1093 = vrot.lane.b32.xlu0 %v346, 28
        %v1094 = vpop.permute.xlu0 %1093
        %1095 = vrot.lane.b32.xlu0 %v349, 28
        %v1096 = vpop.permute.xlu0 %1095
        %1097 = vrot.lane.b32.xlu0 %v351, 28
        %v1098 = vpop.permute.xlu0 %1097
        %1099 = vrot.lane.b32.xlu0 %v354, 28
        %v1100 = vpop.permute.xlu0 %1099
        %1101 = vrot.lane.b32.xlu0 %v356, 28
        %v1102 = vpop.permute.xlu0 %1101
        %1103 = vrot.lane.b32.xlu0 %v359, 28
        %v1104 = vpop.permute.xlu0 %1103
        %1105 = vrot.lane.b32.xlu0 %v361, 28
        %v1106 = vpop.permute.xlu0 %1105
        %1107 = vrot.lane.b32.xlu0 %v364, 28
        %v1108 = vpop.permute.xlu0 %1107
        %1109 = vrot.lane.b32.xlu0 %v366, 28
        %v1110 = vpop.permute.xlu0 %1109
        %1111 = vrot.lane.b32.xlu0 %v369, 28
        %v1112 = vpop.permute.xlu0 %1111
        %1113 = vrot.lane.b32.xlu0 %v371, 28
        %v1114 = vpop.permute.xlu0 %1113
        %1115 = vrot.lane.b32.xlu0 %v374, 28
        %v1116 = vpop.permute.xlu0 %1115
        %1117 = vrot.lane.b32.xlu0 %v376, 28
        %v1118 = vpop.permute.xlu0 %1117
        %1119 = vrot.lane.b32.xlu0 %v379, 28
        %v1120 = vpop.permute.xlu0 %1119
        %1121 = vrot.lane.b32.xlu0 %v381, 28
        %v1122 = vpop.permute.xlu0 %1121
        %1123 = vrot.lane.b32.xlu0 %v384, 28
        %v1124 = vpop.permute.xlu0 %1123
        %1125 = vrot.lane.b32.xlu0 %v386, 28
        %v1126 = vpop.permute.xlu0 %1125
        %1127 = vrot.lane.b32.xlu0 %v389, 28
        %v1128 = vpop.permute.xlu0 %1127
        %1129 = vrot.lane.b32.xlu0 %v391, 28
        %v1130 = vpop.permute.xlu0 %1129
        %1131 = vrot.lane.b32.xlu0 %v478, 28
        %v1132 = vpop.permute.xlu0 %1131
        %1133 = vrot.lane.b32.xlu0 %v480, 28
        %v1134 = vpop.permute.xlu0 %1133
        %1135 = vrot.lane.b32.xlu0 %v491, 28
        %v1136 = vpop.permute.xlu0 %1135
        %1137 = vrot.lane.b32.xlu0 %v493, 28
        %v1138 = vpop.permute.xlu0 %1137
        %1171 = vrot.lane.b32.xlu0 %v405, 32
        %v1172 = vpop.permute.xlu0 %1171
        %1173 = vrot.lane.b32.xlu0 %v407, 32
        %v1174 = vpop.permute.xlu0 %1173
        %1175 = vrot.lane.b32.xlu0 %v410, 32
        %v1176 = vpop.permute.xlu0 %1175
        %1177 = vrot.lane.b32.xlu0 %v412, 32
        %v1178 = vpop.permute.xlu0 %1177
        %1179 = vrot.lane.b32.xlu0 %v415, 32
        %v1180 = vpop.permute.xlu0 %1179
        %1181 = vrot.lane.b32.xlu0 %v417, 32
        %v1182 = vpop.permute.xlu0 %1181
        %1183 = vrot.lane.b32.xlu0 %v420, 32
        %v1184 = vpop.permute.xlu0 %1183
        %1185 = vrot.lane.b32.xlu0 %v422, 32
        %v1186 = vpop.permute.xlu0 %1185
        %1187 = vrot.lane.b32.xlu0 %v425, 32
        %v1188 = vpop.permute.xlu0 %1187
        %1189 = vrot.lane.b32.xlu0 %v427, 32
        %v1190 = vpop.permute.xlu0 %1189
        %1191 = vrot.lane.b32.xlu0 %v430, 32
        %v1192 = vpop.permute.xlu0 %1191
        %1193 = vrot.lane.b32.xlu0 %v432, 32
        %v1194 = vpop.permute.xlu0 %1193
        %1195 = vrot.lane.b32.xlu0 %v435, 32
        %v1196 = vpop.permute.xlu0 %1195
        %1197 = vrot.lane.b32.xlu0 %v437, 32
        %v1198 = vpop.permute.xlu0 %1197
        %1199 = vrot.lane.b32.xlu0 %v440, 32
        %v1200 = vpop.permute.xlu0 %1199
        %1201 = vrot.lane.b32.xlu0 %v442, 32
        %v1202 = vpop.permute.xlu0 %1201
        %1203 = vrot.lane.b32.xlu0 %v445, 32
        %v1204 = vpop.permute.xlu0 %1203
        %1205 = vrot.lane.b32.xlu0 %v447, 32
        %v1206 = vpop.permute.xlu0 %1205
        %1207 = vrot.lane.b32.xlu0 %v450, 32
        %v1208 = vpop.permute.xlu0 %1207
        %1209 = vrot.lane.b32.xlu0 %v452, 32
        %v1210 = vpop.permute.xlu0 %1209
        %1211 = vrot.lane.b32.xlu0 %v455, 32
        %v1212 = vpop.permute.xlu0 %1211
        %1213 = vrot.lane.b32.xlu0 %v457, 32
        %v1214 = vpop.permute.xlu0 %1213
        %1215 = vrot.lane.b32.xlu0 %v460, 32
        %v1216 = vpop.permute.xlu0 %1215
        %1217 = vrot.lane.b32.xlu0 %v462, 32
        %v1218 = vpop.permute.xlu0 %1217
        %1219 = vrot.lane.b32.xlu0 %v465, 32
        %v1220 = vpop.permute.xlu0 %1219
        %1221 = vrot.lane.b32.xlu0 %v467, 32
        %v1222 = vpop.permute.xlu0 %1221
        %1223 = vrot.lane.b32.xlu0 %v470, 32
        %v1224 = vpop.permute.xlu0 %1223
        %1225 = vrot.lane.b32.xlu0 %v472, 32
        %v1226 = vpop.permute.xlu0 %1225
        %1227 = vrot.lane.b32.xlu0 %v483, 32
        %v1228 = vpop.permute.xlu0 %1227
        %1229 = vrot.lane.b32.xlu0 %v485, 32
        %v1230 = vpop.permute.xlu0 %1229
        %1231 = vrot.lane.b32.xlu0 %v496, 32
        %v1232 = vpop.permute.xlu0 %1231
        %1233 = vrot.lane.b32.xlu0 %v498, 32
        %v1234 = vpop.permute.xlu0 %1233
        %vm1267 = vcmask 31744
        %v1268 = vsel %vm1267, %v209, %v500
        %v1269 = vsel %vm1267, %v210, %v502
        %v1270 = vsel %vm1267, %v212, %v504
        %v1271 = vsel %vm1267, %v213, %v506
        %v1272 = vsel %vm1267, %v215, %v508
        %v1273 = vsel %vm1267, %v216, %v510
        %v1274 = vsel %vm1267, %v218, %v512
        %v1275 = vsel %vm1267, %v219, %v514
        %v1276 = vsel %vm1267, %v221, %v516
        %v1277 = vsel %vm1267, %v222, %v518
        %v1278 = vsel %vm1267, %v224, %v520
        %v1279 = vsel %vm1267, %v225, %v522
        %v1280 = vsel %vm1267, %v227, %v524
        %v1281 = vsel %vm1267, %v228, %v526
        %v1282 = vsel %vm1267, %v230, %v528
        %v1283 = vsel %vm1267, %v231, %v530
        %v1284 = vsel %vm1267, %v233, %v532
        %v1285 = vsel %vm1267, %v234, %v534
        %v1286 = vsel %vm1267, %v236, %v536
        %v1287 = vsel %vm1267, %v237, %v538
        %v1288 = vsel %vm1267, %v239, %v540
        %v1289 = vsel %vm1267, %v240, %v542
        %v1290 = vsel %vm1267, %v242, %v544
        %v1291 = vsel %vm1267, %v243, %v546
        %v1292 = vsel %vm1267, %v245, %v548
        %v1293 = vsel %vm1267, %v246, %v550
        %v1294 = vsel %vm1267, %v248, %v552
        %v1295 = vsel %vm1267, %v249, %v554
        %v1296 = vsel %vm1267, %v251, %v556
        %v1297 = vsel %vm1267, %v252, %v558
        %v1298 = vsel %vm1267, %v254, %v560
        %v1299 = vsel %vm1267, %v255, %v562
        %vm1300 = vcmask 64512
        %v1301 = vsel %vm1300, %v1268, %v596
        %v1302 = vsel %vm1300, %v1269, %v598
        %v1303 = vsel %vm1300, %v1270, %v600
        %v1304 = vsel %vm1300, %v1271, %v602
        %v1305 = vsel %vm1300, %v1272, %v604
        %v1306 = vsel %vm1300, %v1273, %v606
        %v1307 = vsel %vm1300, %v1274, %v608
        %v1308 = vsel %vm1300, %v1275, %v610
        %v1309 = vsel %vm1300, %v1276, %v612
        %v1310 = vsel %vm1300, %v1277, %v614
        %v1311 = vsel %vm1300, %v1278, %v616
        %v1312 = vsel %vm1300, %v1279, %v618
        %v1313 = vsel %vm1300, %v1280, %v620
        %v1314 = vsel %vm1300, %v1281, %v622
        %v1315 = vsel %vm1300, %v1282, %v624
        %v1316 = vsel %vm1300, %v1283, %v626
        %v1317 = vsel %vm1300, %v1284, %v628
        %v1318 = vsel %vm1300, %v1285, %v630
        %v1319 = vsel %vm1300, %v1286, %v632
        %v1320 = vsel %vm1300, %v1287, %v634
        %v1321 = vsel %vm1300, %v1288, %v636
        %v1322 = vsel %vm1300, %v1289, %v638
        %v1323 = vsel %vm1300, %v1290, %v640
        %v1324 = vsel %vm1300, %v1291, %v642
        %v1325 = vsel %vm1300, %v1292, %v644
        %v1326 = vsel %vm1300, %v1293, %v646
        %v1327 = vsel %vm1300, %v1294, %v648
        %v1328 = vsel %vm1300, %v1295, %v650
        %v1329 = vsel %vm1300, %v1296, %v652
        %v1330 = vsel %vm1300, %v1297, %v654
        %v1331 = vsel %vm1300, %v1298, %v656
        %v1332 = vsel %vm1300, %v1299, %v658
        %vm1333 = vcmask 97280
        %v1334 = vsel %vm1333, %v1301, %v692
        %v1335 = vsel %vm1333, %v1302, %v694
        %v1336 = vsel %vm1333, %v1303, %v696
        %v1337 = vsel %vm1333, %v1304, %v698
        %v1338 = vsel %vm1333, %v1305, %v700
        %v1339 = vsel %vm1333, %v1306, %v702
        %v1340 = vsel %vm1333, %v1307, %v704
        %v1341 = vsel %vm1333, %v1308, %v706
        %v1342 = vsel %vm1333, %v1309, %v708
        %v1343 = vsel %vm1333, %v1310, %v710
        %v1344 = vsel %vm1333, %v1311, %v712
        %v1345 = vsel %vm1333, %v1312, %v714
        %v1346 = vsel %vm1333, %v1313, %v716
        %v1347 = vsel %vm1333, %v1314, %v718
        %v1348 = vsel %vm1333, %v1315, %v720
        %v1349 = vsel %vm1333, %v1316, %v722
        %v1350 = vsel %vm1333, %v1317, %v724
        %v1351 = vsel %vm1333, %v1318, %v726
        %v1352 = vsel %vm1333, %v1319, %v728
        %v1353 = vsel %vm1333, %v1320, %v730
        %v1354 = vsel %vm1333, %v1321, %v732
        %v1355 = vsel %vm1333, %v1322, %v734
        %v1356 = vsel %vm1333, %v1323, %v736
        %v1357 = vsel %vm1333, %v1324, %v738
        %v1358 = vsel %vm1333, %v1325, %v740
        %v1359 = vsel %vm1333, %v1326, %v742
        %v1360 = vsel %vm1333, %v1327, %v744
        %v1361 = vsel %vm1333, %v1328, %v746
        %v1362 = vsel %vm1333, %v1329, %v748
        %v1363 = vsel %vm1333, %v1330, %v750
        %v1364 = vsel %vm1333, %v1331, %v752
        %v1365 = vsel %vm1333, %v1332, %v754
        %vm1366 = vcmask 130048
        %v1367 = vsel %vm1366, %v1334, %v788
        %v1368 = vsel %vm1366, %v1335, %v790
        %v1369 = vsel %vm1366, %v1336, %v792
        %v1370 = vsel %vm1366, %v1337, %v794
        %v1371 = vsel %vm1366, %v1338, %v796
        %v1372 = vsel %vm1366, %v1339, %v798
        %v1373 = vsel %vm1366, %v1340, %v800
        %v1374 = vsel %vm1366, %v1341, %v802
        %v1375 = vsel %vm1366, %v1342, %v804
        %v1376 = vsel %vm1366, %v1343, %v806
        %v1377 = vsel %vm1366, %v1344, %v808
        %v1378 = vsel %vm1366, %v1345, %v810
        %v1379 = vsel %vm1366, %v1346, %v812
        %v1380 = vsel %vm1366, %v1347, %v814
        %v1381 = vsel %vm1366, %v1348, %v816
        %v1382 = vsel %vm1366, %v1349, %v818
        %v1383 = vsel %vm1366, %v1350, %v820
        %v1384 = vsel %vm1366, %v1351, %v822
        %v1385 = vsel %vm1366, %v1352, %v824
        %v1386 = vsel %vm1366, %v1353, %v826
        %v1387 = vsel %vm1366, %v1354, %v828
        %v1388 = vsel %vm1366, %v1355, %v830
        %v1389 = vsel %vm1366, %v1356, %v832
        %v1390 = vsel %vm1366, %v1357, %v834
        %v1391 = vsel %vm1366, %v1358, %v836
        %v1392 = vsel %vm1366, %v1359, %v838
        %v1393 = vsel %vm1366, %v1360, %v840
        %v1394 = vsel %vm1366, %v1361, %v842
        %v1395 = vsel %vm1366, %v1362, %v844
        %v1396 = vsel %vm1366, %v1363, %v846
        %v1397 = vsel %vm1366, %v1364, %v848
        %v1398 = vsel %vm1366, %v1365, %v850
        %vm1399 = vcmask 162816
        %v1400 = vsel %vm1399, %v1367, %v884
        %v1401 = vsel %vm1399, %v1368, %v886
        %v1402 = vsel %vm1399, %v1369, %v888
        %v1403 = vsel %vm1399, %v1370, %v890
        %v1404 = vsel %vm1399, %v1371, %v892
        %v1405 = vsel %vm1399, %v1372, %v894
        %v1406 = vsel %vm1399, %v1373, %v896
        %v1407 = vsel %vm1399, %v1374, %v898
        %v1408 = vsel %vm1399, %v1375, %v900
        %v1409 = vsel %vm1399, %v1376, %v902
        %v1410 = vsel %vm1399, %v1377, %v904
        %v1411 = vsel %vm1399, %v1378, %v906
        %v1412 = vsel %vm1399, %v1379, %v908
        %v1413 = vsel %vm1399, %v1380, %v910
        %v1414 = vsel %vm1399, %v1381, %v912
        %v1415 = vsel %vm1399, %v1382, %v914
        %v1416 = vsel %vm1399, %v1383, %v916
        %v1417 = vsel %vm1399, %v1384, %v918
        %v1418 = vsel %vm1399, %v1385, %v920
        %v1419 = vsel %vm1399, %v1386, %v922
        %v1420 = vsel %vm1399, %v1387, %v924
        %v1421 = vsel %vm1399, %v1388, %v926
        %v1422 = vsel %vm1399, %v1389, %v928
        %v1423 = vsel %vm1399, %v1390, %v930
        %v1424 = vsel %vm1399, %v1391, %v932
        %v1425 = vsel %vm1399, %v1392, %v934
        %v1426 = vsel %vm1399, %v1393, %v936
        %v1427 = vsel %vm1399, %v1394, %v938
        %v1428 = vsel %vm1399, %v1395, %v940
        %v1429 = vsel %vm1399, %v1396, %v942
        %v1430 = vsel %vm1399, %v1397, %v944
        %v1431 = vsel %vm1399, %v1398, %v946
        %vm1432 = vcmask 195584
        %v1433 = vsel %vm1432, %v1400, %v980
        %v1434 = vsel %vm1432, %v1401, %v982
        %v1435 = vsel %vm1432, %v1402, %v984
        %v1436 = vsel %vm1432, %v1403, %v986
        %v1437 = vsel %vm1432, %v1404, %v988
        %v1438 = vsel %vm1432, %v1405, %v990
        %v1439 = vsel %vm1432, %v1406, %v992
        %v1440 = vsel %vm1432, %v1407, %v994
        %v1441 = vsel %vm1432, %v1408, %v996
        %v1442 = vsel %vm1432, %v1409, %v998
        %v1443 = vsel %vm1432, %v1410, %v1000
        %v1444 = vsel %vm1432, %v1411, %v1002
        %v1445 = vsel %vm1432, %v1412, %v1004
        %v1446 = vsel %vm1432, %v1413, %v1006
        %v1447 = vsel %vm1432, %v1414, %v1008
        %v1448 = vsel %vm1432, %v1415, %v1010
        %v1449 = vsel %vm1432, %v1416, %v1012
        %v1450 = vsel %vm1432, %v1417, %v1014
        %v1451 = vsel %vm1432, %v1418, %v1016
        %v1452 = vsel %vm1432, %v1419, %v1018
        %v1453 = vsel %vm1432, %v1420, %v1020
        %v1454 = vsel %vm1432, %v1421, %v1022
        %v1455 = vsel %vm1432, %v1422, %v1024
        %v1456 = vsel %vm1432, %v1423, %v1026
        %v1457 = vsel %vm1432, %v1424, %v1028
        %v1458 = vsel %vm1432, %v1425, %v1030
        %v1459 = vsel %vm1432, %v1426, %v1032
        %v1460 = vsel %vm1432, %v1427, %v1034
        %v1461 = vsel %vm1432, %v1428, %v1036
        %v1462 = vsel %vm1432, %v1429, %v1038
        %v1463 = vsel %vm1432, %v1430, %v1040
        %v1464 = vsel %vm1432, %v1431, %v1042
        %vm1465 = vcmask 228352
        %v1466 = vsel %vm1465, %v1433, %v1076
        %v1467 = vsel %vm1465, %v1434, %v1078
        %v1468 = vsel %vm1465, %v1435, %v1080
        %v1469 = vsel %vm1465, %v1436, %v1082
        %v1470 = vsel %vm1465, %v1437, %v1084
        %v1471 = vsel %vm1465, %v1438, %v1086
        %v1472 = vsel %vm1465, %v1439, %v1088
        %v1473 = vsel %vm1465, %v1440, %v1090
        %v1474 = vsel %vm1465, %v1441, %v1092
        %v1475 = vsel %vm1465, %v1442, %v1094
        %v1476 = vsel %vm1465, %v1443, %v1096
        %v1477 = vsel %vm1465, %v1444, %v1098
        %v1478 = vsel %vm1465, %v1445, %v1100
        %v1479 = vsel %vm1465, %v1446, %v1102
        %v1480 = vsel %vm1465, %v1447, %v1104
        %v1481 = vsel %vm1465, %v1448, %v1106
        %v1482 = vsel %vm1465, %v1449, %v1108
        %v1483 = vsel %vm1465, %v1450, %v1110
        %v1484 = vsel %vm1465, %v1451, %v1112
        %v1485 = vsel %vm1465, %v1452, %v1114
        %v1486 = vsel %vm1465, %v1453, %v1116
        %v1487 = vsel %vm1465, %v1454, %v1118
        %v1488 = vsel %vm1465, %v1455, %v1120
        %v1489 = vsel %vm1465, %v1456, %v1122
        %v1490 = vsel %vm1465, %v1457, %v1124
        %v1491 = vsel %vm1465, %v1458, %v1126
        %v1492 = vsel %vm1465, %v1459, %v1128
        %v1493 = vsel %vm1465, %v1460, %v1130
        %v1494 = vsel %vm1465, %v1461, %v1132
        %v1495 = vsel %vm1465, %v1462, %v1134
        %v1496 = vsel %vm1465, %v1463, %v1136
        %v1497 = vsel %vm1465, %v1464, %v1138
        %vm1498 = vcmask 261120
        %v1499 = vsel %vm1498, %v1466, %v1172
        %v1500 = vsel %vm1498, %v1467, %v1174
        %v1501 = vsel %vm1498, %v1468, %v1176
        %v1502 = vsel %vm1498, %v1469, %v1178
        %v1503 = vsel %vm1498, %v1470, %v1180
        %v1504 = vsel %vm1498, %v1471, %v1182
        %v1505 = vsel %vm1498, %v1472, %v1184
        %v1506 = vsel %vm1498, %v1473, %v1186
        %v1507 = vsel %vm1498, %v1474, %v1188
        %v1508 = vsel %vm1498, %v1475, %v1190
        %v1509 = vsel %vm1498, %v1476, %v1192
        %v1510 = vsel %vm1498, %v1477, %v1194
        %v1511 = vsel %vm1498, %v1478, %v1196
        %v1512 = vsel %vm1498, %v1479, %v1198
        %v1513 = vsel %vm1498, %v1480, %v1200
        %v1514 = vsel %vm1498, %v1481, %v1202
        %v1515 = vsel %vm1498, %v1482, %v1204
        %v1516 = vsel %vm1498, %v1483, %v1206
        %v1517 = vsel %vm1498, %v1484, %v1208
        %v1518 = vsel %vm1498, %v1485, %v1210
        %v1519 = vsel %vm1498, %v1486, %v1212
        %v1520 = vsel %vm1498, %v1487, %v1214
        %v1521 = vsel %vm1498, %v1488, %v1216
        %v1522 = vsel %vm1498, %v1489, %v1218
        %v1523 = vsel %vm1498, %v1490, %v1220
        %v1524 = vsel %vm1498, %v1491, %v1222
        %v1525 = vsel %vm1498, %v1492, %v1224
        %v1526 = vsel %vm1498, %v1493, %v1226
        %v1527 = vsel %vm1498, %v1494, %v1228
        %v1528 = vsel %vm1498, %v1495, %v1230
        %v1529 = vsel %vm1498, %v1496, %v1232
        %v1530 = vsel %vm1498, %v1497, %v1234
        %v1531 = vld [vmem:[%s1] sm:$0xff]
        %v1532 = vld [vmem:[%s1 + $0x8] sm:$0xff]
        %v1533 = vld [vmem:[%s1 + $0x10] sm:$0xff]
        %v1534 = vld [vmem:[%s1 + $0x18] sm:$0xff]
        %v1535 = vld [vmem:[%s1 + $0x20] sm:$0xf]
        %v1536 = vld [vmem:[%s2] sm:$0x1]
        %v1538 = vlaneseq
        %v1539 = vshrl.u32 %v1538, 7
        %v1540 = vsub.s32 0, %v1539
        %v1541 = vrot.slane %v1536, %v1540
        %vm1543 = vcmask 293888
        %v1545 = vsel %vm1543, %v1499, 0
        %v1548 = vsel %vm1543, %v1500, 0
        %v1551 = vsel %vm1543, %v1501, 0
        %v1554 = vsel %vm1543, %v1502, 0
        %v1557 = vsel %vm1543, %v1503, 0
        %v1560 = vsel %vm1543, %v1504, 0
        %v1563 = vsel %vm1543, %v1505, 0
        %v1566 = vsel %vm1543, %v1506, 0
        %v1569 = vsel %vm1543, %v1507, 0
        %v1572 = vsel %vm1543, %v1508, 0
        %v1575 = vsel %vm1543, %v1509, 0
        %v1578 = vsel %vm1543, %v1510, 0
        %v1581 = vsel %vm1543, %v1511, 0
        %v1584 = vsel %vm1543, %v1512, 0
        %v1587 = vsel %vm1543, %v1513, 0
        %v1590 = vsel %vm1543, %v1514, 0
        %v1593 = vsel %vm1543, %v1515, 0
        %v1596 = vsel %vm1543, %v1516, 0
        %v1599 = vsel %vm1543, %v1517, 0
        %v1602 = vsel %vm1543, %v1518, 0
        %v1605 = vsel %vm1543, %v1519, 0
        %v1608 = vsel %vm1543, %v1520, 0
        %v1611 = vsel %vm1543, %v1521, 0
        %v1614 = vsel %vm1543, %v1522, 0
        %v1617 = vsel %vm1543, %v1523, 0
        %v1620 = vsel %vm1543, %v1524, 0
        %v1623 = vsel %vm1543, %v1525, 0
        %v1626 = vsel %vm1543, %v1526, 0
        %v1629 = vsel %vm1543, %v1527, 0
        %v1632 = vsel %vm1543, %v1528, 0
        %v1635 = vsel %vm1543, %v1529, 0
        %v1638 = vsel %vm1543, %v1530, 0
        %vm1640 = vcmask 1043456
        %v1642 = vsel %vm1640, %v1535, 0
        %1644 = vmatprep.subr.mxu0 0.0
        %1645 = vmatpush1.msra.mxu0 %v1531
        %1646 = vmatprep.subr.mxu0 0.0
        %1647 = vmatpush1.msra.mxu0 %v1532
        %1648 = vmatprep.subr.mxu0 0.0
        %1649 = vmatpush1.msra.mxu0 %v1533
        %1650 = vmatprep.subr.mxu0 0.0
        %1651 = vmatpush1.msra.mxu0 %v1534
        %1652 = vmatprep.subr.mxu0 0.0
        %1653 = vmatpush1.msra.mxu0 %v1642
        %1654 = vmatprep.subr.mxu0 0.0
        %1655 = vmatpush1.msra.mxu0 0.0
        %1656 = vmatprep.subr.mxu0 0.0
        %1657 = vmatpush1.msra.mxu0 0.0
        %1658 = vmatprep.subr.mxu0 0.0
        %1659 = vmatpush1.msra.mxu0 0.0
        %1660 = vmatprep.subr.mxu0 0.0
        %1661 = vmatpush1.msra.mxu0 0.0
        %1662 = vmatprep.subr.mxu0 0.0
        %1663 = vmatpush1.msra.mxu0 0.0
        %1664 = vmatprep.subr.mxu0 0.0
        %1665 = vmatpush1.msra.mxu0 0.0
        %1666 = vmatprep.subr.mxu0 0.0
        %1667 = vmatpush1.msra.mxu0 0.0
        %1668 = vmatprep.subr.mxu0 0.0
        %1669 = vmatpush1.msra.mxu0 0.0
        %1670 = vmatprep.subr.mxu0 0.0
        %1671 = vmatpush1.msra.mxu0 0.0
        %1672 = vmatprep.subr.mxu0 0.0
        %1673 = vmatpush1.msra.mxu0 0.0
        %1674 = vmatprep.subr.mxu0 0.0
        %1675 = vmatpush1.msra.mxu0 0.0
        %1676 = vmatprep.subr.mxu0 0.0
        %1677 = vmatpush1.msra.mxu0 0.0
        %1678 = vmatprep.subr.mxu0 0.0
        %1679 = vmatpush1.msra.mxu0 0.0
        %1680 = vmatprep.subr.mxu0 0.0
        %1681 = vmatpush1.msra.mxu0 0.0
        %1682 = vmatprep.subr.mxu0 0.0
        %1683 = vmatpush1.msra.mxu0 0.0
        %1684 = vmatprep.subr.mxu0 0.0
        %1685 = vmatpush1.msra.mxu0 0.0
        %1686 = vmatprep.subr.mxu0 0.0
        %1687 = vmatpush1.msra.mxu0 0.0
        %1688 = vmatprep.subr.mxu0 0.0
        %1689 = vmatpush1.msra.mxu0 0.0
        %1690 = vmatprep.subr.mxu0 0.0
        %1691 = vmatpush1.msra.mxu0 0.0
        %1692 = vmatprep.subr.mxu0 0.0
        %1693 = vmatpush1.msra.mxu0 0.0
        %1694 = vmatprep.subr.mxu0 0.0
        %1695 = vmatpush1.msra.mxu0 0.0
        %1696 = vmatprep.subr.mxu0 0.0
        %1697 = vmatpush1.msra.mxu0 0.0
        %1698 = vmatprep.subr.mxu0 0.0
        %1699 = vmatpush1.msra.mxu0 0.0
        %1700 = vmatprep.subr.mxu0 0.0
        %1701 = vmatpush1.msra.mxu0 0.0
        %1702 = vmatprep.subr.mxu0 0.0
        %1703 = vmatpush1.msra.mxu0 0.0
        %1704 = vmatprep.subr.mxu0 0.0
        %1705 = vmatpush1.msra.mxu0 0.0
        %1706 = vmatprep.subr.mxu0 0.0
        %1707 = vmatpush1.msra.mxu0 0.0
        %1708 = vmatprep.mubr.f32.mxu0 0.0
        %1709 = vmatmul.mubr.f32.gmra.mrb[0].mxu0 %v1545
        %v1710 = vpop.f32.mrb[0].mxu0
        %v1711 = vadd.f32 %v1541, %v1710
        %v1712 = vpop.f32.mrb[0].mxu0
        %1713 = vmatprep.mubr.f32.mxu0 0.0
        %1714 = vmatmul.mubr.f32.gmra.mrb[0].mxu0 %v1548
        %v1715 = vpop.f32.mrb[0].mxu0
        %v1716 = vadd.f32 %v1541, %v1715
        %v1717 = vpop.f32.mrb[0].mxu0
        %1718 = vmatprep.mubr.f32.mxu0 0.0
        %1719 = vmatmul.mubr.f32.gmra.mrb[0].mxu0 %v1551
        %v1720 = vpop.f32.mrb[0].mxu0
        %v1721 = vadd.f32 %v1541, %v1720
        %v1722 = vpop.f32.mrb[0].mxu0
        %1723 = vmatprep.mubr.f32.mxu0 0.0
        %1724 = vmatmul.mubr.f32.gmra.mrb[0].mxu0 %v1554
        %v1725 = vpop.f32.mrb[0].mxu0
        %v1726 = vadd.f32 %v1541, %v1725
        %v1727 = vpop.f32.mrb[0].mxu0
        %1728 = vmatprep.mubr.f32.mxu0 0.0
        %1729 = vmatmul.mubr.f32.gmra.mrb[0].mxu0 %v1557
        %v1730 = vpop.f32.mrb[0].mxu0
        %v1731 = vadd.f32 %v1541, %v1730
        %v1732 = vpop.f32.mrb[0].mxu0
        %1733 = vmatprep.mubr.f32.mxu0 0.0
        %1734 = vmatmul.mubr.f32.gmra.mrb[0].mxu0 %v1560
        %v1735 = vpop.f32.mrb[0].mxu0
        %v1736 = vadd.f32 %v1541, %v1735
        %v1737 = vpop.f32.mrb[0].mxu0
        %1738 = vmatprep.mubr.f32.mxu0 0.0
        %1739 = vmatmul.mubr.f32.gmra.mrb[0].mxu0 %v1563
        %v1740 = vpop.f32.mrb[0].mxu0
        %v1741 = vadd.f32 %v1541, %v1740
        %v1742 = vpop.f32.mrb[0].mxu0
        %1743 = vmatprep.mubr.f32.mxu0 0.0
        %1744 = vmatmul.mubr.f32.gmra.mrb[0].mxu0 %v1566
        %v1745 = vpop.f32.mrb[0].mxu0
        %v1746 = vadd.f32 %v1541, %v1745
        %v1747 = vpop.f32.mrb[0].mxu0
        %1748 = vmatprep.mubr.f32.mxu0 0.0
        %1749 = vmatmul.mubr.f32.gmra.mrb[0].mxu0 %v1569
        %v1750 = vpop.f32.mrb[0].mxu0
        %v1751 = vadd.f32 %v1541, %v1750
        %v1752 = vpop.f32.mrb[0].mxu0
        %1753 = vmatprep.mubr.f32.mxu0 0.0
        %1754 = vmatmul.mubr.f32.gmra.mrb[0].mxu0 %v1572
        %v1755 = vpop.f32.mrb[0].mxu0
        %v1756 = vadd.f32 %v1541, %v1755
        %v1757 = vpop.f32.mrb[0].mxu0
        %1758 = vmatprep.mubr.f32.mxu0 0.0
        %1759 = vmatmul.mubr.f32.gmra.mrb[0].mxu0 %v1575
        %v1760 = vpop.f32.mrb[0].mxu0
        %v1761 = vadd.f32 %v1541, %v1760
        %v1762 = vpop.f32.mrb[0].mxu0
        %1763 = vmatprep.mubr.f32.mxu0 0.0
        %1764 = vmatmul.mubr.f32.gmra.mrb[0].mxu0 %v1578
        %v1765 = vpop.f32.mrb[0].mxu0
        %v1766 = vadd.f32 %v1541, %v1765
        %v1767 = vpop.f32.mrb[0].mxu0
        %1768 = vmatprep.mubr.f32.mxu0 0.0
        %1769 = vmatmul.mubr.f32.gmra.mrb[0].mxu0 %v1581
        %v1770 = vpop.f32.mrb[0].mxu0
        %v1771 = vadd.f32 %v1541, %v1770
        %v1772 = vpop.f32.mrb[0].mxu0
        %1773 = vmatprep.mubr.f32.mxu0 0.0
        %1774 = vmatmul.mubr.f32.gmra.mrb[0].mxu0 %v1584
        %v1775 = vpop.f32.mrb[0].mxu0
        %v1776 = vadd.f32 %v1541, %v1775
        %v1777 = vpop.f32.mrb[0].mxu0
        %1778 = vmatprep.mubr.f32.mxu0 0.0
        %1779 = vmatmul.mubr.f32.gmra.mrb[0].mxu0 %v1587
        %v1780 = vpop.f32.mrb[0].mxu0
        %v1781 = vadd.f32 %v1541, %v1780
        %v1782 = vpop.f32.mrb[0].mxu0
        %1783 = vmatprep.mubr.f32.mxu0 0.0
        %1784 = vmatmul.mubr.f32.gmra.mrb[0].mxu0 %v1590
        %v1785 = vpop.f32.mrb[0].mxu0
        %v1786 = vadd.f32 %v1541, %v1785
        %v1787 = vpop.f32.mrb[0].mxu0
        %1788 = vmatprep.mubr.f32.mxu0 0.0
        %1789 = vmatmul.mubr.f32.gmra.mrb[0].mxu0 %v1593
        %v1790 = vpop.f32.mrb[0].mxu0
        %v1791 = vadd.f32 %v1541, %v1790
        %v1792 = vpop.f32.mrb[0].mxu0
        %1793 = vmatprep.mubr.f32.mxu0 0.0
        %1794 = vmatmul.mubr.f32.gmra.mrb[0].mxu0 %v1596
        %v1795 = vpop.f32.mrb[0].mxu0
        %v1796 = vadd.f32 %v1541, %v1795
        %v1797 = vpop.f32.mrb[0].mxu0
        %1798 = vmatprep.mubr.f32.mxu0 0.0
        %1799 = vmatmul.mubr.f32.gmra.mrb[0].mxu0 %v1599
        %v1800 = vpop.f32.mrb[0].mxu0
        %v1801 = vadd.f32 %v1541, %v1800
        %v1802 = vpop.f32.mrb[0].mxu0
        %1803 = vmatprep.mubr.f32.mxu0 0.0
        %1804 = vmatmul.mubr.f32.gmra.mrb[0].mxu0 %v1602
        %v1805 = vpop.f32.mrb[0].mxu0
        %v1806 = vadd.f32 %v1541, %v1805
        %v1807 = vpop.f32.mrb[0].mxu0
        %1808 = vmatprep.mubr.f32.mxu0 0.0
        %1809 = vmatmul.mubr.f32.gmra.mrb[0].mxu0 %v1605
        %v1810 = vpop.f32.mrb[0].mxu0
        %v1811 = vadd.f32 %v1541, %v1810
        %v1812 = vpop.f32.mrb[0].mxu0
        %1813 = vmatprep.mubr.f32.mxu0 0.0
        %1814 = vmatmul.mubr.f32.gmra.mrb[0].mxu0 %v1608
        %v1815 = vpop.f32.mrb[0].mxu0
        %v1816 = vadd.f32 %v1541, %v1815
        %v1817 = vpop.f32.mrb[0].mxu0
        %1818 = vmatprep.mubr.f32.mxu0 0.0
        %1819 = vmatmul.mubr.f32.gmra.mrb[0].mxu0 %v1611
        %v1820 = vpop.f32.mrb[0].mxu0
        %v1821 = vadd.f32 %v1541, %v1820
        %v1822 = vpop.f32.mrb[0].mxu0
        %1823 = vmatprep.mubr.f32.mxu0 0.0
        %1824 = vmatmul.mubr.f32.gmra.mrb[0].mxu0 %v1614
        %v1825 = vpop.f32.mrb[0].mxu0
        %v1826 = vadd.f32 %v1541, %v1825
        %v1827 = vpop.f32.mrb[0].mxu0
        %1828 = vmatprep.mubr.f32.mxu0 0.0
        %1829 = vmatmul.mubr.f32.gmra.mrb[0].mxu0 %v1617
        %v1830 = vpop.f32.mrb[0].mxu0
        %v1831 = vadd.f32 %v1541, %v1830
        %v1832 = vpop.f32.mrb[0].mxu0
        %1833 = vmatprep.mubr.f32.mxu0 0.0
        %1834 = vmatmul.mubr.f32.gmra.mrb[0].mxu0 %v1620
        %v1835 = vpop.f32.mrb[0].mxu0
        %v1836 = vadd.f32 %v1541, %v1835
        %v1837 = vpop.f32.mrb[0].mxu0
        %1838 = vmatprep.mubr.f32.mxu0 0.0
        %1839 = vmatmul.mubr.f32.gmra.mrb[0].mxu0 %v1623
        %v1840 = vpop.f32.mrb[0].mxu0
        %v1841 = vadd.f32 %v1541, %v1840
        %v1842 = vpop.f32.mrb[0].mxu0
        %1843 = vmatprep.mubr.f32.mxu0 0.0
        %1844 = vmatmul.mubr.f32.gmra.mrb[0].mxu0 %v1626
        %v1845 = vpop.f32.mrb[0].mxu0
        %v1846 = vadd.f32 %v1541, %v1845
        %v1847 = vpop.f32.mrb[0].mxu0
        %1848 = vmatprep.mubr.f32.mxu0 0.0
        %1849 = vmatmul.mubr.f32.gmra.mrb[0].mxu0 %v1629
        %v1850 = vpop.f32.mrb[0].mxu0
        %v1851 = vadd.f32 %v1541, %v1850
        %v1852 = vpop.f32.mrb[0].mxu0
        %1853 = vmatprep.mubr.f32.mxu0 0.0
        %1854 = vmatmul.mubr.f32.gmra.mrb[0].mxu0 %v1632
        %v1855 = vpop.f32.mrb[0].mxu0
        %v1856 = vadd.f32 %v1541, %v1855
        %v1857 = vpop.f32.mrb[0].mxu0
        %1858 = vmatprep.mubr.f32.mxu0 0.0
        %1859 = vmatmul.mubr.f32.gmra.mrb[0].mxu0 %v1635
        %v1860 = vpop.f32.mrb[0].mxu0
        %v1861 = vadd.f32 %v1541, %v1860
        %v1862 = vpop.f32.mrb[0].mxu0
        %1863 = vmatprep.mubr.f32.mxu0 0.0
        %1864 = vmatmul.mubr.f32.gmra.mrb[0].mxu0 %v1638
        %v1865 = vpop.f32.mrb[0].mxu0
        %v1866 = vadd.f32 %v1541, %v1865
        %v1867 = vpop.f32.mrb[0].mxu0
        %1868 = vdwg.mxu0
        %v1869 = vsel %vm1267, %v1711, 0.0
        %v1870 = vsel %vm1267, %v1716, 0.0
        %v1871 = vadd.f32 %v1869, %v1870
        %v1872 = vsel %vm1267, %v1721, 0.0
        %v1873 = vadd.f32 %v1871, %v1872
        %v1874 = vsel %vm1267, %v1726, 0.0
        %v1875 = vadd.f32 %v1873, %v1874
        %v1876 = vsel %vm1267, %v1731, 0.0
        %v1877 = vadd.f32 %v1875, %v1876
        %v1878 = vsel %vm1267, %v1736, 0.0
        %v1879 = vadd.f32 %v1877, %v1878
        %v1880 = vsel %vm1267, %v1741, 0.0
        %v1881 = vadd.f32 %v1879, %v1880
        %v1882 = vsel %vm1267, %v1746, 0.0
        %v1883 = vadd.f32 %v1881, %v1882
        %v1884 = vsel %vm1267, %v1751, 0.0
        %v1885 = vadd.f32 %v1883, %v1884
        %v1886 = vsel %vm1267, %v1756, 0.0
        %v1887 = vadd.f32 %v1885, %v1886
        %v1888 = vsel %vm1267, %v1761, 0.0
        %v1889 = vadd.f32 %v1887, %v1888
        %v1890 = vsel %vm1267, %v1766, 0.0
        %v1891 = vadd.f32 %v1889, %v1890
        %v1892 = vsel %vm1267, %v1771, 0.0
        %v1893 = vadd.f32 %v1891, %v1892
        %v1894 = vsel %vm1267, %v1776, 0.0
        %v1895 = vadd.f32 %v1893, %v1894
        %v1896 = vsel %vm1267, %v1781, 0.0
        %v1897 = vadd.f32 %v1895, %v1896
        %v1898 = vsel %vm1267, %v1786, 0.0
        %v1899 = vadd.f32 %v1897, %v1898
        %v1900 = vsel %vm1267, %v1791, 0.0
        %v1901 = vadd.f32 %v1899, %v1900
        %v1902 = vsel %vm1267, %v1796, 0.0
        %v1903 = vadd.f32 %v1901, %v1902
        %v1904 = vsel %vm1267, %v1801, 0.0
        %v1905 = vadd.f32 %v1903, %v1904
        %v1906 = vsel %vm1267, %v1806, 0.0
        %v1907 = vadd.f32 %v1905, %v1906
        %v1908 = vsel %vm1267, %v1811, 0.0
        %v1909 = vadd.f32 %v1907, %v1908
        %v1910 = vsel %vm1267, %v1816, 0.0
        %v1911 = vadd.f32 %v1909, %v1910
        %v1912 = vsel %vm1267, %v1821, 0.0
        %v1913 = vadd.f32 %v1911, %v1912
        %v1914 = vsel %vm1267, %v1826, 0.0
        %v1915 = vadd.f32 %v1913, %v1914
        %v1916 = vsel %vm1267, %v1831, 0.0
        %v1917 = vadd.f32 %v1915, %v1916
        %v1918 = vsel %vm1267, %v1836, 0.0
        %v1919 = vadd.f32 %v1917, %v1918
        %v1920 = vsel %vm1267, %v1841, 0.0
        %v1921 = vadd.f32 %v1919, %v1920
        %v1922 = vsel %vm1267, %v1846, 0.0
        %v1923 = vadd.f32 %v1921, %v1922
        %v1924 = vsel %vm1267, %v1851, 0.0
        %v1925 = vadd.f32 %v1923, %v1924
        %v1926 = vsel %vm1267, %v1856, 0.0
        %v1927 = vadd.f32 %v1925, %v1926
        %v1928 = vsel %vm1267, %v1861, 0.0
        %v1929 = vadd.f32 %v1927, %v1928
        %v1930 = vsel %vm1267, %v1866, 0.0
        %v1931 = vadd.f32 %v1929, %v1930
        %v1932 = vrot.slane %v1931, 4
        %v1933 = vadd.f32 %v1931, %v1932
        %v1934 = vrot.slane %v1933, 2
        %v1935 = vadd.f32 %v1933, %v1934
        %v1936 = vrot.slane %v1935, 1
        %v1937 = vadd.f32 %v1935, %v1936
        %vm1938 = vcmask 24576
        %1939 = vst.msk [vmem:[%s198] sm:$0x1] %vm1938, %v1937
        %v1940 = vmul.f32 %v1711, %v1711
        %v1941 = vmul.f32 %v1716, %v1716
        %v1942 = vmul.f32 %v1721, %v1721
        %v1943 = vmul.f32 %v1726, %v1726
        %v1944 = vmul.f32 %v1731, %v1731
        %v1945 = vmul.f32 %v1736, %v1736
        %v1946 = vmul.f32 %v1741, %v1741
        %v1947 = vmul.f32 %v1746, %v1746
        %v1948 = vmul.f32 %v1751, %v1751
        %v1949 = vmul.f32 %v1756, %v1756
        %v1950 = vmul.f32 %v1761, %v1761
        %v1951 = vmul.f32 %v1766, %v1766
        %v1952 = vmul.f32 %v1771, %v1771
        %v1953 = vmul.f32 %v1776, %v1776
        %v1954 = vmul.f32 %v1781, %v1781
        %v1955 = vmul.f32 %v1786, %v1786
        %v1956 = vmul.f32 %v1791, %v1791
        %v1957 = vmul.f32 %v1796, %v1796
        %v1958 = vmul.f32 %v1801, %v1801
        %v1959 = vmul.f32 %v1806, %v1806
        %v1960 = vmul.f32 %v1811, %v1811
        %v1961 = vmul.f32 %v1816, %v1816
        %v1962 = vmul.f32 %v1821, %v1821
        %v1963 = vmul.f32 %v1826, %v1826
        %v1964 = vmul.f32 %v1831, %v1831
        %v1965 = vmul.f32 %v1836, %v1836
        %v1966 = vmul.f32 %v1841, %v1841
        %v1967 = vmul.f32 %v1846, %v1846
        %v1968 = vmul.f32 %v1851, %v1851
        %v1969 = vmul.f32 %v1856, %v1856
        %v1970 = vmul.f32 %v1861, %v1861
        %v1971 = vmul.f32 %v1866, %v1866
        %v1972 = vsel %vm1267, %v1940, 0.0
        %v1973 = vsel %vm1267, %v1941, 0.0
        %v1974 = vadd.f32 %v1972, %v1973
        %v1975 = vsel %vm1267, %v1942, 0.0
        %v1976 = vadd.f32 %v1974, %v1975
        %v1977 = vsel %vm1267, %v1943, 0.0
        %v1978 = vadd.f32 %v1976, %v1977
        %v1979 = vsel %vm1267, %v1944, 0.0
        %v1980 = vadd.f32 %v1978, %v1979
        %v1981 = vsel %vm1267, %v1945, 0.0
        %v1982 = vadd.f32 %v1980, %v1981
        %v1983 = vsel %vm1267, %v1946, 0.0
        %v1984 = vadd.f32 %v1982, %v1983
        %v1985 = vsel %vm1267, %v1947, 0.0
        %v1986 = vadd.f32 %v1984, %v1985
        %v1987 = vsel %vm1267, %v1948, 0.0
        %v1988 = vadd.f32 %v1986, %v1987
        %v1989 = vsel %vm1267, %v1949, 0.0
        %v1990 = vadd.f32 %v1988, %v1989
        %v1991 = vsel %vm1267, %v1950, 0.0
        %v1992 = vadd.f32 %v1990, %v1991
        %v1993 = vsel %vm1267, %v1951, 0.0
        %v1994 = vadd.f32 %v1992, %v1993
        %v1995 = vsel %vm1267, %v1952, 0.0
        %v1996 = vadd.f32 %v1994, %v1995
        %v1997 = vsel %vm1267, %v1953, 0.0
        %v1998 = vadd.f32 %v1996, %v1997
        %v1999 = vsel %vm1267, %v1954, 0.0
        %v2000 = vadd.f32 %v1998, %v1999
        %v2001 = vsel %vm1267, %v1955, 0.0
        %v2002 = vadd.f32 %v2000, %v2001
        %v2003 = vsel %vm1267, %v1956, 0.0
        %v2004 = vadd.f32 %v2002, %v2003
        %v2005 = vsel %vm1267, %v1957, 0.0
        %v2006 = vadd.f32 %v2004, %v2005
        %v2007 = vsel %vm1267, %v1958, 0.0
        %v2008 = vadd.f32 %v2006, %v2007
        %v2009 = vsel %vm1267, %v1959, 0.0
        %v2010 = vadd.f32 %v2008, %v2009
        %v2011 = vsel %vm1267, %v1960, 0.0
        %v2012 = vadd.f32 %v2010, %v2011
        %v2013 = vsel %vm1267, %v1961, 0.0
        %v2014 = vadd.f32 %v2012, %v2013
        %v2015 = vsel %vm1267, %v1962, 0.0
        %v2016 = vadd.f32 %v2014, %v2015
        %v2017 = vsel %vm1267, %v1963, 0.0
        %v2018 = vadd.f32 %v2016, %v2017
        %v2019 = vsel %vm1267, %v1964, 0.0
        %v2020 = vadd.f32 %v2018, %v2019
        %v2021 = vsel %vm1267, %v1965, 0.0
        %v2022 = vadd.f32 %v2020, %v2021
        %v2023 = vsel %vm1267, %v1966, 0.0
        %v2024 = vadd.f32 %v2022, %v2023
        %v2025 = vsel %vm1267, %v1967, 0.0
        %v2026 = vadd.f32 %v2024, %v2025
        %v2027 = vsel %vm1267, %v1968, 0.0
        %v2028 = vadd.f32 %v2026, %v2027
        %v2029 = vsel %vm1267, %v1969, 0.0
        %v2030 = vadd.f32 %v2028, %v2029
        %v2031 = vsel %vm1267, %v1970, 0.0
        %v2032 = vadd.f32 %v2030, %v2031
        %v2033 = vsel %vm1267, %v1971, 0.0
        %v2034 = vadd.f32 %v2032, %v2033
        %v2035 = vrot.slane %v2034, 4
        %v2036 = vadd.f32 %v2034, %v2035
        %v2037 = vrot.slane %v2036, 2
        %v2038 = vadd.f32 %v2036, %v2037
        %v2039 = vrot.slane %v2038, 1
        %v2040 = vadd.f32 %v2038, %v2039
        %2041 = vst.msk [vmem:[%s198 + $0x1] sm:$0x1] %vm1938, %v2040
        %2042 = vst.msk [vmem:[%s208] sm:$0xff] %vm1267, %v1711
        %2043 = vst.msk [vmem:[%s208 + $0x8] sm:$0xff] %vm1267, %v1716
        %2044 = vst.msk [vmem:[%s208 + $0x10] sm:$0xff] %vm1267, %v1721
        %2045 = vst.msk [vmem:[%s208 + $0x18] sm:$0xff] %vm1267, %v1726
        %2046 = vst.msk [vmem:[%s208 + $0x20] sm:$0xff] %vm1267, %v1731
        %2047 = vst.msk [vmem:[%s208 + $0x28] sm:$0xff] %vm1267, %v1736
        %2048 = vst.msk [vmem:[%s208 + $0x30] sm:$0xff] %vm1267, %v1741
        %2049 = vst.msk [vmem:[%s208 + $0x38] sm:$0xff] %vm1267, %v1746
        %2050 = vst.msk [vmem:[%s208 + $0x40] sm:$0xff] %vm1267, %v1751
        %2051 = vst.msk [vmem:[%s208 + $0x48] sm:$0xff] %vm1267, %v1756
        %2052 = vst.msk [vmem:[%s208 + $0x50] sm:$0xff] %vm1267, %v1761
        %2053 = vst.msk [vmem:[%s208 + $0x58] sm:$0xff] %vm1267, %v1766
        %2054 = vst.msk [vmem:[%s208 + $0x60] sm:$0xff] %vm1267, %v1771
        %2055 = vst.msk [vmem:[%s208 + $0x68] sm:$0xff] %vm1267, %v1776
        %2056 = vst.msk [vmem:[%s208 + $0x70] sm:$0xff] %vm1267, %v1781
        %2057 = vst.msk [vmem:[%s208 + $0x78] sm:$0xff] %vm1267, %v1786
        %2058 = vst.msk [vmem:[%s208 + $0x80] sm:$0xff] %vm1267, %v1791
        %2059 = vst.msk [vmem:[%s208 + $0x88] sm:$0xff] %vm1267, %v1796
        %2060 = vst.msk [vmem:[%s208 + $0x90] sm:$0xff] %vm1267, %v1801
        %2061 = vst.msk [vmem:[%s208 + $0x98] sm:$0xff] %vm1267, %v1806
        %2062 = vst.msk [vmem:[%s208 + $0xa0] sm:$0xff] %vm1267, %v1811
        %2063 = vst.msk [vmem:[%s208 + $0xa8] sm:$0xff] %vm1267, %v1816
        %2064 = vst.msk [vmem:[%s208 + $0xb0] sm:$0xff] %vm1267, %v1821
        %2065 = vst.msk [vmem:[%s208 + $0xb8] sm:$0xff] %vm1267, %v1826
        %2066 = vst.msk [vmem:[%s208 + $0xc0] sm:$0xff] %vm1267, %v1831
        %2067 = vst.msk [vmem:[%s208 + $0xc8] sm:$0xff] %vm1267, %v1836
        %2068 = vst.msk [vmem:[%s208 + $0xd0] sm:$0xff] %vm1267, %v1841
        %2069 = vst.msk [vmem:[%s208 + $0xd8] sm:$0xff] %vm1267, %v1846
        %2070 = vst.msk [vmem:[%s208 + $0xe0] sm:$0xff] %vm1267, %v1851
        %2071 = vst.msk [vmem:[%s208 + $0xe8] sm:$0xff] %vm1267, %v1856
        %2072 = vst.msk [vmem:[%s208 + $0xf0] sm:$0xff] %vm1267, %v1861
        %2073 = vst.msk [vmem:[%s208 + $0xf8] sm:$0xff] %vm1267, %v1866
        %p2074 = scmp.lt.s32.totalorder %s19, 1
        %s2075 = scalar_select %p2074, %s19, 1
        %s2076 = smul.addr %s2075, 32
        %s2077 = smul.addr %s2076, 8
        %s2078 = scalar_lea.vmem %s3, %s2077
        %s2079 = sand.u32 %s121, 1
        %s2080 = scalar_lea.sflag [#allocation3], %s2079
        %s2081 = sand.u32 %s121, 1
        %s2082 = smul.addr %s2081, 2
        %s2083 = scalar_lea.vmem [#allocation2], %s2082
        // Predicated region
        $region33: #{tpu_custom_call.1} parent=31 // pred_check
          %p2084 = pneg %p105
        $region34: #{tpu_custom_call.1} parent=31 // pred_check_branch
          %2086 = sbr.rel (%p2084) target = $region36
        $region35: #{tpu_custom_call.1} parent=31 // pred_region
          _
        $region36: #{tpu_custom_call.1} parent=31 // pred_fallthru
          _
        // Predicated region
        $region37: #{tpu_custom_call.1} parent=31 // pred_check
          %p2087 = pneg %p131
        $region38: #{tpu_custom_call.1} parent=31 // pred_check_branch
          %2089 = sbr.rel (%p2087) target = $region40
        $region39: #{tpu_custom_call.1} parent=31 // pred_region
          %s2091 = ssub.s32 32, 32
          %2092 = vsyncadd %s2080, %s2091
          %s2093 = smul.addr %s19, 32
          %s2094 = scalar_lea.hbm %s4, %s2093
          %s2096 = sshll.u32 %s2083, 4
          %s2097 = int_to_ptr.vmem [resolvable:$true] %s2096
          %2099 = dma.vmem_to_hbm [thread:$0]  %s2097, 32, %s2094, %s2080
        $region40: #{tpu_custom_call.1} parent=31 // pred_fallthru
          _
      $region32: #{tpu_custom_call.1} parent=5 // pred_fallthru
        _
      %p2100 = scmp.le.s32.totalorder 2, %s14
      // Predicated region
      $region41: #{tpu_custom_call.1} parent=5 // pred_check
        %p2101 = pneg %p2100
      $region42: #{tpu_custom_call.1} parent=5 // pred_check_branch
        %2103 = sbr.rel (%p2101) target = $region44
      $region43: #{tpu_custom_call.1} parent=5 // pred_region
        %s2104 = ssub.s32 %s14, 2
        // Predicated region
        $region45: #{tpu_custom_call.1} parent=43 // pred_check
          %p2105 = pneg %p111
        $region46: #{tpu_custom_call.1} parent=43 // pred_check_branch
          %2107 = sbr.rel (%p2105) target = $region48
        $region47: #{tpu_custom_call.1} parent=43 // pred_region
          %p2108 = scmp.lt.s32.totalorder %s20, 1
          %s2109 = scalar_select %p2108, %s20, 1
          %s2110 = smul.addr %s2109, 32
          %s2111 = smul.addr %s2110, 8
          %s2112 = scalar_lea.vmem %s3, %s2111
        $region48: #{tpu_custom_call.1} parent=43 // pred_fallthru
          _
        // Predicated region
        $region49: #{tpu_custom_call.1} parent=43 // pred_check
          %p2113 = pneg %p137
        $region50: #{tpu_custom_call.1} parent=43 // pred_check_branch
          %2115 = sbr.rel (%p2113) target = $region52
        $region51: #{tpu_custom_call.1} parent=43 // pred_region
          %s2116 = sand.u32 %s122, 1
          %s2117 = scalar_lea.sflag [#allocation3], %s2116
          %s2118 = sand.u32 %s122, 1
          %s2119 = smul.addr %s2118, 2
          %s2120 = scalar_lea.vmem [#allocation2], %s2119
          %2121 = dma.done %s2117, 32
        $region52: #{tpu_custom_call.1} parent=43 // pred_fallthru
          _
      $region44: #{tpu_custom_call.1} parent=5 // pred_fallthru
        _
    $region6: #{tpu_custom_call.1} parent=1 // loop_footer
      %s18 = sadd.s32 1, %s14
    $region7: #{tpu_custom_call.1} parent=1 // loop_footer_branch
      %13 = sbr.rel target = $region3
    $region8: #{tpu_custom_call.1} parent=1 // loop_exit
      _
    %2122 = vsyncpa [#allocation3], 1
    %s2123 = scalar_lea.sflag [#allocation3], 1
    %2124 = vsyncpa %s2123, 1

</llo_original>
